<compile_context>
chip_gen: v5e
topology: v5e:2x2
jax: 0.10.0
libtpu: 0.0.40
codegen_flags: <defaults>
</compile_context>

<pallas_src>
import functools
import math

import jax
import jax.numpy as jnp
from jax.experimental import pallas as pl
from jax.experimental.pallas import tpu as pltpu

LN_EPS = 1e-5


def _round_up(x, m):
    return ((x + m - 1) // m) * m


def _actor_ensemble_kernel(depth, width, mxu_dtype, x_ref, *refs):
    # refs = [w0, (wmid if depth > 1), ln_vecs, wf, bf, out]
    if depth > 1:
        w0_ref, wmid_ref, ln_ref, wf_ref, bf_ref, out_ref = refs
    else:
        w0_ref, ln_ref, wf_ref, bf_ref, out_ref = refs
        wmid_ref = None

    f32 = jnp.float32

    def layernorm(z, g, be):
        mu = jnp.mean(z, axis=-1, keepdims=True)
        var = jnp.mean((z - mu) ** 2, axis=-1, keepdims=True)
        return (z - mu) * jax.lax.rsqrt(var + LN_EPS) * g + be

    h = x_ref[...].astype(f32)

    # Layer 0: Linear(dim_obs -> width) + LayerNorm + CReLU (kept as hp/hn pair).
    v0 = ln_ref[0]                              # (3, width): [bias, gamma, beta]
    z = jnp.dot(h.astype(mxu_dtype), w0_ref[...],
                preferred_element_type=f32) + v0[0:1, :]
    z = layernorm(z, v0[1:2, :], v0[2:3, :])
    hp = jnp.maximum(z, 0.0)
    hn = jnp.maximum(-z, 0.0)

    # Hidden layers 1..depth-1: weight-split dual dot instead of lane concat.
    for l in range(1, depth):
        w = wmid_ref[l - 1]                     # (2*width, width) bf16
        vl = ln_ref[l]                          # (3, width)
        z = (jnp.dot(hp.astype(mxu_dtype), w[:width, :], preferred_element_type=f32)
             + jnp.dot(hn.astype(mxu_dtype), w[width:, :], preferred_element_type=f32)
             + vl[0:1, :])
        z = layernorm(z, vl[1:2, :], vl[2:3, :])
        hp = jnp.maximum(z, 0.0)
        hn = jnp.maximum(-z, 0.0)

    # Final Linear(2*width -> dim_out_padded) + tanh + clamp; lane-dense output.
    wf = wf_ref[...]                            # (2*width, dim_out_padded) bf16
    out = (jnp.dot(hp.astype(mxu_dtype), wf[:width, :], preferred_element_type=f32)
           + jnp.dot(hn.astype(mxu_dtype), wf[width:, :], preferred_element_type=f32)
           + bf_ref[...])
    out = jnp.tanh(out)
    out_ref[...] = jnp.clip(out, -0.9999, 0.9999).astype(out_ref.dtype)


def init_params(key, dim_obs, dim_act, depth, width, n_elements,
                mxu_dtype=jnp.bfloat16):
    """Packed, TPU-friendly parameter layout.

      w0   : (dim_obs, width)            mxu_dtype
      wmid : (depth-1, 2*width, width)   mxu_dtype        (only if depth > 1)
      ln   : (depth, 3, width)           f32, rows = [linear bias, LN gamma, LN beta]
      wf   : (2*width, dim_out_padded)   mxu_dtype, zero-padded columns
      bf   : (1, dim_out_padded)         f32, zero-padded
    """
    dim_out = dim_act * n_elements
    dim_out_p = _round_up(dim_out, 128)

    def linear(k, d_in, d_out):
        kw, kb = jax.random.split(k)
        bound = 1.0 / math.sqrt(d_in)
        w = jax.random.uniform(kw, (d_in, d_out), jnp.float32, -bound, bound)
        b = jax.random.uniform(kb, (d_out,), jnp.float32, -bound, bound)
        return w, b

    keys = jax.random.split(key, depth + 1)

    ones = jnp.ones((width,), jnp.float32)
    zeros = jnp.zeros((width,), jnp.float32)

    w0, b0 = linear(keys[0], dim_obs, width)
    ln_rows = [jnp.stack([b0, ones, zeros])]

    wmids = []
    for l in range(1, depth):
        w, b = linear(keys[l], 2 * width, width)
        wmids.append(w)
        ln_rows.append(jnp.stack([b, ones, zeros]))

    wf, bf = linear(keys[depth], 2 * width, dim_out)
    wf_p = jnp.zeros((2 * width, dim_out_p), jnp.float32).at[:, :dim_out].set(wf)
    bf_p = jnp.zeros((1, dim_out_p), jnp.float32).at[0, :dim_out].set(bf)

    params = {
        "w0": w0.astype(mxu_dtype),
        "ln": jnp.stack(ln_rows).astype(jnp.float32),   # (depth, 3, width)
        "wf": wf_p.astype(mxu_dtype),
        "bf": bf_p,
    }
    if depth > 1:
        params["wmid"] = jnp.stack(wmids).astype(mxu_dtype)
    return params


def actor_net_ensemble_forward(x, params, *, depth, width, dim_act, n_elements,
                               block_b=256, mxu_dtype=jnp.bfloat16):
    B, D = x.shape
    dim_out = dim_act * n_elements
    dim_out_p = params["wf"].shape[1]

    block_b = min(block_b, B)
    grid = (pl.cdiv(B, block_b),)

    arg_list = [x, params["w0"]]
    if depth > 1:
        arg_list.append(params["wmid"])
    arg_list += [params["ln"], params["wf"], params["bf"]]

    def const_spec(a):
        nd = a.ndim
        return pl.BlockSpec(a.shape, lambda *_: (0,) * nd)

    in_specs = [pl.BlockSpec((block_b, D), lambda i: (i, 0))]
    in_specs += [const_spec(a) for a in arg_list[1:]]
    out_spec = pl.BlockSpec((block_b, dim_out_p), lambda i: (i, 0))

    # Advisory cost hint for the XLA scheduler.
    flops = 2 * B * (D * width
                     + (depth - 1) * (2 * width) * width
                     + (2 * width) * dim_out_p)
    transcendentals = B * depth + B * dim_out_p          # rsqrt per row/layer + tanh
    param_bytes = sum(int(a.size) * a.dtype.itemsize for a in arg_list[1:])
    bytes_accessed = (int(x.size) * x.dtype.itemsize
                      + B * dim_out_p * 4 + param_bytes)
    cost = pl.CostEstimate(flops=flops, transcendentals=transcendentals,
                           bytes_accessed=bytes_accessed)

    out_flat = pl.pallas_call(
        functools.partial(_actor_ensemble_kernel, depth, width, mxu_dtype),
        out_shape=jax.ShapeDtypeStruct((B, dim_out_p), jnp.float32),
        grid=grid,
        in_specs=in_specs,
        out_specs=out_spec,
        compiler_params=pltpu.CompilerParams(
            dimension_semantics=("parallel",)),
        cost_estimate=cost,
    )(*arg_list)

    # Drop the lane padding and apply .view(-1, n_elements, dim_act) — wrapper glue.
    out = out_flat[:, :dim_out].reshape(-1, n_elements, dim_act)
    return out, None


def _reference_forward(x, params, *, depth, width, dim_act, n_elements,
                       mxu_dtype=jnp.bfloat16):
    """Pure-JAX reference mirroring the kernel math (bf16 at the MXU, f32 elsewhere)."""
    f32 = jnp.float32
    dim_out = dim_act * n_elements

    def layernorm(z, g, be):
        mu = jnp.mean(z, -1, keepdims=True)
        var = jnp.mean((z - mu) ** 2, -1, keepdims=True)
        return (z - mu) * jax.lax.rsqrt(var + LN_EPS) * g + be

    ln = params["ln"]
    z = jnp.dot(x.astype(mxu_dtype), params["w0"],
                preferred_element_type=f32) + ln[0, 0][None, :]
    z = layernorm(z, ln[0, 1][None, :], ln[0, 2][None, :])
    hp, hn = jnp.maximum(z, 0.0), jnp.maximum(-z, 0.0)
    for l in range(1, depth):
        w = params["wmid"][l - 1]
        z = (jnp.dot(hp.astype(mxu_dtype), w[:width], preferred_element_type=f32)
             + jnp.dot(hn.astype(mxu_dtype), w[width:], preferred_element_type=f32)
             + ln[l, 0][None, :])
        z = layernorm(z, ln[l, 1][None, :], ln[l, 2][None, :])
        hp, hn = jnp.maximum(z, 0.0), jnp.maximum(-z, 0.0)
    wf = params["wf"]
    out = (jnp.dot(hp.astype(mxu_dtype), wf[:width], preferred_element_type=f32)
           + jnp.dot(hn.astype(mxu_dtype), wf[width:], preferred_element_type=f32)
           + params["bf"])
    out = jnp.clip(jnp.tanh(out), -0.9999, 0.9999)
    return out[:, :dim_out].reshape(-1, n_elements, dim_act)


if __name__ == "__main__":
    # Small shapes consistent with the module (flat-observation MLP ensemble head).
    batch = 128          # 2 grid blocks of 64 -> both v7x TensorCores get work
    dim_obs = (16,)
    dim_act = (4,)
    depth = 3
    width = 128          # lane-dense hidden width, still small
    n_elements = 10
    block_b = 64

    key = jax.random.PRNGKey(0)
    key, kx = jax.random.split(key)
    x = jax.random.normal(kx, (batch, dim_obs[0]), jnp.float32)

    params = init_params(key, dim_obs[0], dim_act[0], depth, width, n_elements)

    out, _ = actor_net_ensemble_forward(
        x, params, depth=depth, width=width, dim_act=dim_act[0],
        n_elements=n_elements, block_b=block_b)
    out = jax.block_until_ready(out)

    ref = _reference_forward(
        x, params, depth=depth, width=width, dim_act=dim_act[0],
        n_elements=n_elements)

    assert out.shape == (batch, n_elements, dim_act[0])
    err = float(jnp.max(jnp.abs(out - ref)))
    assert jnp.allclose(out, ref, atol=1e-3, rtol=1e-3), err

    print("KERNEL_OK")
</pallas_src>

<mosaic_0001>
module attributes {stable_mosaic.version = 11 : i64} {
  func.func @_actor_ensemble_kernel(%arg0: i32, %arg1: memref<64x16xf32, #tpu.memory_space<vmem>>, %arg2: memref<16x128xbf16, #tpu.memory_space<vmem>>, %arg3: memref<2x256x128xbf16, #tpu.memory_space<vmem>>, %arg4: memref<3x3x128xf32, #tpu.memory_space<vmem>>, %arg5: memref<256x128xbf16, #tpu.memory_space<vmem>>, %arg6: memref<1x128xf32, #tpu.memory_space<vmem>>, %arg7: memref<64x128xf32, #tpu.memory_space<vmem>>) attributes {dimension_semantics = [#tpu.dimension_semantics<parallel>], iteration_bounds = array<i64: 2>, scalar_prefetch = 0 : i64, scratch_operands = 0 : i64, tpu.core_type = #tpu.core_type<tc>, window_params = [{transform_indices = @transform_0, window_bounds = array<i64: 64, 16>}, {pipeline_mode = #tpu.pipeline_mode<synchronous>, transform_indices = @transform_1, window_bounds = array<i64: 16, 128>}, {pipeline_mode = #tpu.pipeline_mode<synchronous>, transform_indices = @transform_2, window_bounds = array<i64: 2, 256, 128>}, {pipeline_mode = #tpu.pipeline_mode<synchronous>, transform_indices = @transform_3, window_bounds = array<i64: 3, 3, 128>}, {pipeline_mode = #tpu.pipeline_mode<synchronous>, transform_indices = @transform_4, window_bounds = array<i64: 256, 128>}, {pipeline_mode = #tpu.pipeline_mode<synchronous>, transform_indices = @transform_5, window_bounds = array<i64: 1, 128>}, {transform_indices = @transform_6, window_bounds = array<i64: 64, 128>}]} {
    %c0 = arith.constant 0 : index
    %c0_0 = arith.constant 0 : index
    %0 = vector.load %arg1[%c0, %c0_0] : memref<64x16xf32, #tpu.memory_space<vmem>>, vector<64x16xf32>
    %c0_1 = arith.constant 0 : index
    %c0_2 = arith.constant 0 : index
    %c0_3 = arith.constant 0 : index
    %1 = vector.load %arg4[%c0_1, %c0_2, %c0_3] : memref<3x3x128xf32, #tpu.memory_space<vmem>>, vector<1x3x128xf32>
    %2 = vector.shape_cast %1 : vector<1x3x128xf32> to vector<3x128xf32>
    %3 = arith.truncf %0 : vector<64x16xf32> to vector<64x16xbf16>
    %c0_4 = arith.constant 0 : index
    %c0_5 = arith.constant 0 : index
    %4 = vector.load %arg2[%c0_4, %c0_5] : memref<16x128xbf16, #tpu.memory_space<vmem>>, vector<16x128xbf16>
    %cst = arith.constant dense<0.000000e+00> : vector<64x128xf32>
    %5 = tpu.matmul %3, %4, %cst {dimension_numbers = #tpu.dot_dimension_numbers<[1], [0], [0], [1], [0, 0, 1, 1], [], []>} : vector<64x16xbf16>, vector<16x128xbf16>, vector<64x128xf32> -> vector<64x128xf32>
    %6 = vector.extract_strided_slice %2 {offsets = [0, 0], sizes = [1, 128], strides = [1, 1]} : vector<3x128xf32> to vector<1x128xf32>
    %7 = vector.broadcast %6 : vector<1x128xf32> to vector<64x128xf32>
    %8 = arith.addf %5, %7 : vector<64x128xf32>
    %9 = vector.extract_strided_slice %2 {offsets = [1, 0], sizes = [1, 128], strides = [1, 1]} : vector<3x128xf32> to vector<1x128xf32>
    %10 = vector.extract_strided_slice %2 {offsets = [2, 0], sizes = [1, 128], strides = [1, 1]} : vector<3x128xf32> to vector<1x128xf32>
    %cst_6 = arith.constant dense<0.000000e+00> : vector<64xf32>
    %11 = vector.multi_reduction <add>, %8, %cst_6 [1] : vector<64x128xf32> to vector<64xf32>
    %12 = vector.shape_cast %11 : vector<64xf32> to vector<64x1xf32>
    %cst_7 = arith.constant 1.280000e+02 : f32
    %13 = vector.broadcast %cst_7 : f32 to vector<64x1xf32>
    %14 = arith.divf %12, %13 : vector<64x1xf32>
    %15 = vector.broadcast %14 : vector<64x1xf32> to vector<64x128xf32>
    %16 = arith.subf %8, %15 : vector<64x128xf32>
    %17 = arith.mulf %16, %16 : vector<64x128xf32>
    %cst_8 = arith.constant dense<0.000000e+00> : vector<64xf32>
    %18 = vector.multi_reduction <add>, %17, %cst_8 [1] : vector<64x128xf32> to vector<64xf32>
    %19 = vector.shape_cast %18 : vector<64xf32> to vector<64x1xf32>
    %cst_9 = arith.constant 1.280000e+02 : f32
    %20 = vector.broadcast %cst_9 : f32 to vector<64x1xf32>
    %21 = arith.divf %19, %20 : vector<64x1xf32>
    %22 = vector.broadcast %14 : vector<64x1xf32> to vector<64x128xf32>
    %23 = arith.subf %8, %22 : vector<64x128xf32>
    %cst_10 = arith.constant 9.99999974E-6 : f32
    %24 = vector.broadcast %cst_10 : f32 to vector<64x1xf32>
    %25 = arith.addf %21, %24 : vector<64x1xf32>
    %26 = math.rsqrt %25 : vector<64x1xf32>
    %27 = vector.broadcast %26 : vector<64x1xf32> to vector<64x128xf32>
    %28 = arith.mulf %23, %27 : vector<64x128xf32>
    %29 = vector.broadcast %9 : vector<1x128xf32> to vector<64x128xf32>
    %30 = arith.mulf %28, %29 : vector<64x128xf32>
    %31 = vector.broadcast %10 : vector<1x128xf32> to vector<64x128xf32>
    %32 = arith.addf %30, %31 : vector<64x128xf32>
    %cst_11 = arith.constant 0.000000e+00 : f32
    %33 = vector.broadcast %cst_11 : f32 to vector<64x128xf32>
    %34 = arith.maximumf %32, %33 : vector<64x128xf32>
    %cst_12 = arith.constant 0.000000e+00 : f32
    %35 = vector.broadcast %cst_12 : f32 to vector<64x128xf32>
    %36 = arith.subf %35, %32 : vector<64x128xf32>
    %cst_13 = arith.constant 0.000000e+00 : f32
    %37 = vector.broadcast %cst_13 : f32 to vector<64x128xf32>
    %38 = arith.maximumf %36, %37 : vector<64x128xf32>
    %c0_14 = arith.constant 0 : index
    %c0_15 = arith.constant 0 : index
    %c0_16 = arith.constant 0 : index
    %39 = vector.load %arg3[%c0_14, %c0_15, %c0_16] : memref<2x256x128xbf16, #tpu.memory_space<vmem>>, vector<1x256x128xbf16>
    %40 = vector.shape_cast %39 : vector<1x256x128xbf16> to vector<256x128xbf16>
    %c1 = arith.constant 1 : index
    %c0_17 = arith.constant 0 : index
    %c0_18 = arith.constant 0 : index
    %41 = vector.load %arg4[%c1, %c0_17, %c0_18] : memref<3x3x128xf32, #tpu.memory_space<vmem>>, vector<1x3x128xf32>
    %42 = vector.shape_cast %41 : vector<1x3x128xf32> to vector<3x128xf32>
    %43 = arith.truncf %34 : vector<64x128xf32> to vector<64x128xbf16>
    %44 = vector.extract_strided_slice %40 {offsets = [0, 0], sizes = [128, 128], strides = [1, 1]} : vector<256x128xbf16> to vector<128x128xbf16>
    %cst_19 = arith.constant dense<0.000000e+00> : vector<64x128xf32>
    %45 = tpu.matmul %43, %44, %cst_19 {dimension_numbers = #tpu.dot_dimension_numbers<[1], [0], [0], [1], [0, 0, 1, 1], [], []>} : vector<64x128xbf16>, vector<128x128xbf16>, vector<64x128xf32> -> vector<64x128xf32>
    %46 = arith.truncf %38 : vector<64x128xf32> to vector<64x128xbf16>
    %47 = vector.extract_strided_slice %40 {offsets = [128, 0], sizes = [128, 128], strides = [1, 1]} : vector<256x128xbf16> to vector<128x128xbf16>
    %cst_20 = arith.constant dense<0.000000e+00> : vector<64x128xf32>
    %48 = tpu.matmul %46, %47, %cst_20 {dimension_numbers = #tpu.dot_dimension_numbers<[1], [0], [0], [1], [0, 0, 1, 1], [], []>} : vector<64x128xbf16>, vector<128x128xbf16>, vector<64x128xf32> -> vector<64x128xf32>
    %49 = arith.addf %45, %48 : vector<64x128xf32>
    %50 = vector.extract_strided_slice %42 {offsets = [0, 0], sizes = [1, 128], strides = [1, 1]} : vector<3x128xf32> to vector<1x128xf32>
    %51 = vector.broadcast %50 : vector<1x128xf32> to vector<64x128xf32>
    %52 = arith.addf %49, %51 : vector<64x128xf32>
    %53 = vector.extract_strided_slice %42 {offsets = [1, 0], sizes = [1, 128], strides = [1, 1]} : vector<3x128xf32> to vector<1x128xf32>
    %54 = vector.extract_strided_slice %42 {offsets = [2, 0], sizes = [1, 128], strides = [1, 1]} : vector<3x128xf32> to vector<1x128xf32>
    %cst_21 = arith.constant dense<0.000000e+00> : vector<64xf32>
    %55 = vector.multi_reduction <add>, %52, %cst_21 [1] : vector<64x128xf32> to vector<64xf32>
    %56 = vector.shape_cast %55 : vector<64xf32> to vector<64x1xf32>
    %cst_22 = arith.constant 1.280000e+02 : f32
    %57 = vector.broadcast %cst_22 : f32 to vector<64x1xf32>
    %58 = arith.divf %56, %57 : vector<64x1xf32>
    %59 = vector.broadcast %58 : vector<64x1xf32> to vector<64x128xf32>
    %60 = arith.subf %52, %59 : vector<64x128xf32>
    %61 = arith.mulf %60, %60 : vector<64x128xf32>
    %cst_23 = arith.constant dense<0.000000e+00> : vector<64xf32>
    %62 = vector.multi_reduction <add>, %61, %cst_23 [1] : vector<64x128xf32> to vector<64xf32>
    %63 = vector.shape_cast %62 : vector<64xf32> to vector<64x1xf32>
    %cst_24 = arith.constant 1.280000e+02 : f32
    %64 = vector.broadcast %cst_24 : f32 to vector<64x1xf32>
    %65 = arith.divf %63, %64 : vector<64x1xf32>
    %66 = vector.broadcast %58 : vector<64x1xf32> to vector<64x128xf32>
    %67 = arith.subf %52, %66 : vector<64x128xf32>
    %cst_25 = arith.constant 9.99999974E-6 : f32
    %68 = vector.broadcast %cst_25 : f32 to vector<64x1xf32>
    %69 = arith.addf %65, %68 : vector<64x1xf32>
    %70 = math.rsqrt %69 : vector<64x1xf32>
    %71 = vector.broadcast %70 : vector<64x1xf32> to vector<64x128xf32>
    %72 = arith.mulf %67, %71 : vector<64x128xf32>
    %73 = vector.broadcast %53 : vector<1x128xf32> to vector<64x128xf32>
    %74 = arith.mulf %72, %73 : vector<64x128xf32>
    %75 = vector.broadcast %54 : vector<1x128xf32> to vector<64x128xf32>
    %76 = arith.addf %74, %75 : vector<64x128xf32>
    %cst_26 = arith.constant 0.000000e+00 : f32
    %77 = vector.broadcast %cst_26 : f32 to vector<64x128xf32>
    %78 = arith.maximumf %76, %77 : vector<64x128xf32>
    %cst_27 = arith.constant 0.000000e+00 : f32
    %79 = vector.broadcast %cst_27 : f32 to vector<64x128xf32>
    %80 = arith.subf %79, %76 : vector<64x128xf32>
    %cst_28 = arith.constant 0.000000e+00 : f32
    %81 = vector.broadcast %cst_28 : f32 to vector<64x128xf32>
    %82 = arith.maximumf %80, %81 : vector<64x128xf32>
    %c1_29 = arith.constant 1 : index
    %c0_30 = arith.constant 0 : index
    %c0_31 = arith.constant 0 : index
    %83 = vector.load %arg3[%c1_29, %c0_30, %c0_31] : memref<2x256x128xbf16, #tpu.memory_space<vmem>>, vector<1x256x128xbf16>
    %84 = vector.shape_cast %83 : vector<1x256x128xbf16> to vector<256x128xbf16>
    %c2 = arith.constant 2 : index
    %c0_32 = arith.constant 0 : index
    %c0_33 = arith.constant 0 : index
    %85 = vector.load %arg4[%c2, %c0_32, %c0_33] : memref<3x3x128xf32, #tpu.memory_space<vmem>>, vector<1x3x128xf32>
    %86 = vector.shape_cast %85 : vector<1x3x128xf32> to vector<3x128xf32>
    %87 = arith.truncf %78 : vector<64x128xf32> to vector<64x128xbf16>
    %88 = vector.extract_strided_slice %84 {offsets = [0, 0], sizes = [128, 128], strides = [1, 1]} : vector<256x128xbf16> to vector<128x128xbf16>
    %cst_34 = arith.constant dense<0.000000e+00> : vector<64x128xf32>
    %89 = tpu.matmul %87, %88, %cst_34 {dimension_numbers = #tpu.dot_dimension_numbers<[1], [0], [0], [1], [0, 0, 1, 1], [], []>} : vector<64x128xbf16>, vector<128x128xbf16>, vector<64x128xf32> -> vector<64x128xf32>
    %90 = arith.truncf %82 : vector<64x128xf32> to vector<64x128xbf16>
    %91 = vector.extract_strided_slice %84 {offsets = [128, 0], sizes = [128, 128], strides = [1, 1]} : vector<256x128xbf16> to vector<128x128xbf16>
    %cst_35 = arith.constant dense<0.000000e+00> : vector<64x128xf32>
    %92 = tpu.matmul %90, %91, %cst_35 {dimension_numbers = #tpu.dot_dimension_numbers<[1], [0], [0], [1], [0, 0, 1, 1], [], []>} : vector<64x128xbf16>, vector<128x128xbf16>, vector<64x128xf32> -> vector<64x128xf32>
    %93 = arith.addf %89, %92 : vector<64x128xf32>
    %94 = vector.extract_strided_slice %86 {offsets = [0, 0], sizes = [1, 128], strides = [1, 1]} : vector<3x128xf32> to vector<1x128xf32>
    %95 = vector.broadcast %94 : vector<1x128xf32> to vector<64x128xf32>
    %96 = arith.addf %93, %95 : vector<64x128xf32>
    %97 = vector.extract_strided_slice %86 {offsets = [1, 0], sizes = [1, 128], strides = [1, 1]} : vector<3x128xf32> to vector<1x128xf32>
    %98 = vector.extract_strided_slice %86 {offsets = [2, 0], sizes = [1, 128], strides = [1, 1]} : vector<3x128xf32> to vector<1x128xf32>
    %cst_36 = arith.constant dense<0.000000e+00> : vector<64xf32>
    %99 = vector.multi_reduction <add>, %96, %cst_36 [1] : vector<64x128xf32> to vector<64xf32>
    %100 = vector.shape_cast %99 : vector<64xf32> to vector<64x1xf32>
    %cst_37 = arith.constant 1.280000e+02 : f32
    %101 = vector.broadcast %cst_37 : f32 to vector<64x1xf32>
    %102 = arith.divf %100, %101 : vector<64x1xf32>
    %103 = vector.broadcast %102 : vector<64x1xf32> to vector<64x128xf32>
    %104 = arith.subf %96, %103 : vector<64x128xf32>
    %105 = arith.mulf %104, %104 : vector<64x128xf32>
    %cst_38 = arith.constant dense<0.000000e+00> : vector<64xf32>
    %106 = vector.multi_reduction <add>, %105, %cst_38 [1] : vector<64x128xf32> to vector<64xf32>
    %107 = vector.shape_cast %106 : vector<64xf32> to vector<64x1xf32>
    %cst_39 = arith.constant 1.280000e+02 : f32
    %108 = vector.broadcast %cst_39 : f32 to vector<64x1xf32>
    %109 = arith.divf %107, %108 : vector<64x1xf32>
    %110 = vector.broadcast %102 : vector<64x1xf32> to vector<64x128xf32>
    %111 = arith.subf %96, %110 : vector<64x128xf32>
    %cst_40 = arith.constant 9.99999974E-6 : f32
    %112 = vector.broadcast %cst_40 : f32 to vector<64x1xf32>
    %113 = arith.addf %109, %112 : vector<64x1xf32>
    %114 = math.rsqrt %113 : vector<64x1xf32>
    %115 = vector.broadcast %114 : vector<64x1xf32> to vector<64x128xf32>
    %116 = arith.mulf %111, %115 : vector<64x128xf32>
    %117 = vector.broadcast %97 : vector<1x128xf32> to vector<64x128xf32>
    %118 = arith.mulf %116, %117 : vector<64x128xf32>
    %119 = vector.broadcast %98 : vector<1x128xf32> to vector<64x128xf32>
    %120 = arith.addf %118, %119 : vector<64x128xf32>
    %cst_41 = arith.constant 0.000000e+00 : f32
    %121 = vector.broadcast %cst_41 : f32 to vector<64x128xf32>
    %122 = arith.maximumf %120, %121 : vector<64x128xf32>
    %cst_42 = arith.constant 0.000000e+00 : f32
    %123 = vector.broadcast %cst_42 : f32 to vector<64x128xf32>
    %124 = arith.subf %123, %120 : vector<64x128xf32>
    %cst_43 = arith.constant 0.000000e+00 : f32
    %125 = vector.broadcast %cst_43 : f32 to vector<64x128xf32>
    %126 = arith.maximumf %124, %125 : vector<64x128xf32>
    %c0_44 = arith.constant 0 : index
    %c0_45 = arith.constant 0 : index
    %127 = vector.load %arg5[%c0_44, %c0_45] : memref<256x128xbf16, #tpu.memory_space<vmem>>, vector<256x128xbf16>
    %128 = arith.truncf %122 : vector<64x128xf32> to vector<64x128xbf16>
    %129 = vector.extract_strided_slice %127 {offsets = [0, 0], sizes = [128, 128], strides = [1, 1]} : vector<256x128xbf16> to vector<128x128xbf16>
    %cst_46 = arith.constant dense<0.000000e+00> : vector<64x128xf32>
    %130 = tpu.matmul %128, %129, %cst_46 {dimension_numbers = #tpu.dot_dimension_numbers<[1], [0], [0], [1], [0, 0, 1, 1], [], []>} : vector<64x128xbf16>, vector<128x128xbf16>, vector<64x128xf32> -> vector<64x128xf32>
    %131 = arith.truncf %126 : vector<64x128xf32> to vector<64x128xbf16>
    %132 = vector.extract_strided_slice %127 {offsets = [128, 0], sizes = [128, 128], strides = [1, 1]} : vector<256x128xbf16> to vector<128x128xbf16>
    %cst_47 = arith.constant dense<0.000000e+00> : vector<64x128xf32>
    %133 = tpu.matmul %131, %132, %cst_47 {dimension_numbers = #tpu.dot_dimension_numbers<[1], [0], [0], [1], [0, 0, 1, 1], [], []>} : vector<64x128xbf16>, vector<128x128xbf16>, vector<64x128xf32> -> vector<64x128xf32>
    %134 = arith.addf %130, %133 : vector<64x128xf32>
    %c0_48 = arith.constant 0 : index
    %c0_49 = arith.constant 0 : index
    %135 = vector.load %arg6[%c0_48, %c0_49] : memref<1x128xf32, #tpu.memory_space<vmem>>, vector<1x128xf32>
    %136 = vector.broadcast %135 : vector<1x128xf32> to vector<64x128xf32>
    %137 = arith.addf %134, %136 : vector<64x128xf32>
    %138 = math.tanh %137 : vector<64x128xf32>
    %cst_50 = arith.constant -0.999899983 : f32
    %cst_51 = arith.constant 0.999899983 : f32
    %139 = vector.broadcast %cst_50 : f32 to vector<64x128xf32>
    %140 = arith.maximumf %139, %138 : vector<64x128xf32>
    %141 = vector.broadcast %cst_51 : f32 to vector<64x128xf32>
    %142 = arith.minimumf %141, %140 : vector<64x128xf32>
    %c0_52 = arith.constant 0 : index
    %c0_53 = arith.constant 0 : index
    %143 = vector.load %arg7[%c0_52, %c0_53] : memref<64x128xf32, #tpu.memory_space<vmem>>, vector<64x128xf32>
    tpu.vector_store %arg7[%c0_52, %c0_53], %142 {strides = array<i32>} : memref<64x128xf32, #tpu.memory_space<vmem>>, vector<64x128xf32>,
    return
  }
  func.func @transform_0(%arg0: i32) -> (i32, i32) {
    %c0_i32 = arith.constant 0 : i32
    %c0_i32_0 = arith.constant 0 : i32
    return %arg0, %c0_i32 : i32, i32
  }
  func.func @transform_1(%arg0: i32) -> (i32, i32) {
    %c0_i32 = arith.constant 0 : i32
    %c0_i32_0 = arith.constant 0 : i32
    %c0_i32_1 = arith.constant 0 : i32
    return %c0_i32, %c0_i32_0 : i32, i32
  }
  func.func @transform_2(%arg0: i32) -> (i32, i32, i32) {
    %c0_i32 = arith.constant 0 : i32
    %c0_i32_0 = arith.constant 0 : i32
    %c0_i32_1 = arith.constant 0 : i32
    %c0_i32_2 = arith.constant 0 : i32
    return %c0_i32, %c0_i32_0, %c0_i32_1 : i32, i32, i32
  }
  func.func @transform_3(%arg0: i32) -> (i32, i32, i32) {
    %c0_i32 = arith.constant 0 : i32
    %c0_i32_0 = arith.constant 0 : i32
    %c0_i32_1 = arith.constant 0 : i32
    %c0_i32_2 = arith.constant 0 : i32
    return %c0_i32, %c0_i32_0, %c0_i32_1 : i32, i32, i32
  }
  func.func @transform_4(%arg0: i32) -> (i32, i32) {
    %c0_i32 = arith.constant 0 : i32
    %c0_i32_0 = arith.constant 0 : i32
    %c0_i32_1 = arith.constant 0 : i32
    return %c0_i32, %c0_i32_0 : i32, i32
  }
  func.func @transform_5(%arg0: i32) -> (i32, i32) {
    %c0_i32 = arith.constant 0 : i32
    %c0_i32_0 = arith.constant 0 : i32
    %c0_i32_1 = arith.constant 0 : i32
    return %c0_i32, %c0_i32_0 : i32, i32
  }
  func.func @transform_6(%arg0: i32) -> (i32, i32) {
    %c0_i32 = arith.constant 0 : i32
    %c0_i32_0 = arith.constant 0 : i32
    return %arg0, %c0_i32 : i32, i32
  }
}

</mosaic_0001>

<llo_original>
// kernel: tpu_custom_call.1
$region0: #{tpu_custom_call.1}
  #allocation0 [shape = 'u32[]', space=smem, size = 0x4, offset = 0x4, fixed_abs, tag = 'smem constant byte address 0x4 - core index']
  #allocation1 [shape = 'u32[72,128]{1,0:T(1,128)}', space=vmem, size = 0x9000, scoped, tag = 'internal scratch']
  %s0 = inlined_call_operand.vmem [shape: f32[128,16], index: 0, kind: input, shape index: {}]
  %s1 = inlined_call_operand.hbm [shape: bf16[16,128], index: 1, kind: input, shape index: {}]
  %s2 = inlined_call_operand.hbm [shape: bf16[2,256,128], index: 2, kind: input, shape index: {}]
  %s3 = inlined_call_operand.vmem [shape: f32[3,3,128], index: 3, kind: input, shape index: {}]
  %s4 = inlined_call_operand.vmem [shape: bf16[256,128], index: 4, kind: input, shape index: {}]
  %s5 = inlined_call_operand.vmem [shape: f32[1,128], index: 5, kind: input, shape index: {}]
  %s6 = inlined_call_operand.hbm [shape: f32[128,128], index: 6, kind: output, shape index: {}]
  %s7 = sld [smem:[#allocation0]]
  $region65: #{tpu_custom_call.1} parent=0
    _
  %s9 = ssub.s32 1, %s7
  %s10 = scalar_select 0, %s9, %s7
  $region1: #{tpu_custom_call.1} parent=0
    #allocation2 [shape = 'u8[4096]{0}', space=vmem, size = 0x1000, scoped, tag = 'input window, operand 1, single buffered']
    #allocation3 [shape = 's32[2]{0}', space=sflag, size = 0x8, scoped, tag = 'scoped memory for tpu_custom_call.1']
    #allocation4 [shape = 's32[2]{0}', space=sflag, size = 0x8, scoped, tag = 'scoped memory for tpu_custom_call.1']
    #allocation5 [shape = 'u8[131072]{0}', space=vmem, size = 0x20000, scoped, tag = 'input window, operand 2, single buffered']
    #allocation6 [shape = 's32[1]{0}', space=sflag, size = 0x4, scoped, tag = 'scoped memory for tpu_custom_call.1']
    #allocation7 [shape = 'u8[65536]{0}', space=vmem, size = 0x10000, scoped, tag = 'output window, operand 0']
    %11 = vsyncpa [#allocation3], 0
    %12 = vsyncpa [#allocation6], 0
    %13 = vsyncpa [#allocation4], 0
    %s14 = scalar_lea.sflag [#allocation4], 1
    %15 = vsyncpa %s14, 0
    loop: start=0, step=1, limit=4
    $region2: #{tpu_custom_call.1} parent=1 // loop_pre_header
      _
    $region3: #{tpu_custom_call.1} parent=1 // loop_header
      %s17 = sphi 0, %s21
      %p18 = scmp.ge.s32.totalorder %s17, 4
      %s27 = sphi 0, %s29
      %s30 = sphi 0, %s27
      %s31 = sphi 0, %s30
      %s47 = sphi 0, %s31
      %s51 = sphi 0, %s51
      %s53 = sphi 0, %s51
      %s54 = sphi 0, %s53
      %s68 = sphi 0, %s54
      %s72 = sphi 0, %s72
      %s74 = sphi 0, %s72
      %s75 = sphi 0, %s74
      %s89 = sphi 0, %s75
      %s93 = sphi 0, %s93
      %s95 = sphi 0, %s93
      %s96 = sphi 0, %s95
      %s110 = sphi 0, %s96
      %s114 = sphi 0, %s114
      %s116 = sphi 0, %s114
      %s117 = sphi 0, %s116
      %s131 = sphi 0, %s117
      %s135 = sphi 0, %s135
      %s137 = sphi 0, %s135
      %s138 = sphi 0, %s137
      %s152 = sphi 0, %s138
      %s158 = sphi 0, %s160
      %s161 = sphi 0, %s158
      %s162 = sphi 0, %s161
      %s178 = sphi 0, %s162
    $region4: #{tpu_custom_call.1} parent=1 // loop_header_branch
      %20 = sbr.rel (%p18) target = $region8
    $region5: #{tpu_custom_call.1} parent=1 // loop_body
      %s22 = ssub.s32 %s17, 1
      %s23 = ssub.s32 %s17, 2
      %s24 = sadd.s32 %s17, 1
      %s25 = ssub.s32 %s17, %s24
      %p26 = scmp.eq.s32.totalorder %s25, 0
      %s28 = sadd.s32 %s27, 1
      %s29 = scalar_select %p26, %s27, %s28
      %p32 = pneg %p26
      %p33 = scmp.eq.s32.totalorder %s17, 1
      %p34 = por %p32, %p33
      %p35 = scmp.ne.s32.totalorder %s27, %s30
      %p36 = scmp.eq.s32.totalorder %s17, 0
      %p37 = por %p35, %p36
      %p38 = scmp.ne.s32.totalorder %s27, %s30
      %p39 = scmp.eq.s32.totalorder %s22, 1
      %p40 = por %p38, %p39
      %p41 = scmp.ne.s32.totalorder %s30, %s31
      %p42 = scmp.eq.s32.totalorder %s22, 0
      %p43 = por %p41, %p42
      %p44 = scmp.ne.s32.totalorder %s30, %s31
      %p45 = scmp.eq.s32.totalorder %s23, 1
      %p46 = por %p44, %p45
      %p48 = scmp.ne.s32.totalorder %s31, %s47
      %p49 = scmp.eq.s32.totalorder %s23, 0
      %p50 = por %p48, %p49
      %s52 = sadd.s32 %s51, 1
      %p55 = scmp.eq.s32.totalorder %s17, 1
      %p56 = scmp.ne.s32.totalorder %s51, %s53
      %p57 = scmp.eq.s32.totalorder %s17, 0
      %p58 = por %p56, %p57
      %p59 = scmp.ne.s32.totalorder %s51, %s53
      %p60 = scmp.eq.s32.totalorder %s22, 1
      %p61 = por %p59, %p60
      %p62 = scmp.ne.s32.totalorder %s53, %s54
      %p63 = scmp.eq.s32.totalorder %s22, 0
      %p64 = por %p62, %p63
      %p65 = scmp.ne.s32.totalorder %s53, %s54
      %p66 = scmp.eq.s32.totalorder %s23, 1
      %p67 = por %p65, %p66
      %p69 = scmp.ne.s32.totalorder %s54, %s68
      %p70 = scmp.eq.s32.totalorder %s23, 0
      %p71 = por %p69, %p70
      %s73 = sadd.s32 %s72, 1
      %p76 = scmp.eq.s32.totalorder %s17, 1
      %p77 = scmp.ne.s32.totalorder %s72, %s74
      %p78 = scmp.eq.s32.totalorder %s17, 0
      %p79 = por %p77, %p78
      %p80 = scmp.ne.s32.totalorder %s72, %s74
      %p81 = scmp.eq.s32.totalorder %s22, 1
      %p82 = por %p80, %p81
      %p83 = scmp.ne.s32.totalorder %s74, %s75
      %p84 = scmp.eq.s32.totalorder %s22, 0
      %p85 = por %p83, %p84
      %p86 = scmp.ne.s32.totalorder %s74, %s75
      %p87 = scmp.eq.s32.totalorder %s23, 1
      %p88 = por %p86, %p87
      %p90 = scmp.ne.s32.totalorder %s75, %s89
      %p91 = scmp.eq.s32.totalorder %s23, 0
      %p92 = por %p90, %p91
      %s94 = sadd.s32 %s93, 1
      %p97 = scmp.eq.s32.totalorder %s17, 1
      %p98 = scmp.ne.s32.totalorder %s93, %s95
      %p99 = scmp.eq.s32.totalorder %s17, 0
      %p100 = por %p98, %p99
      %p101 = scmp.ne.s32.totalorder %s93, %s95
      %p102 = scmp.eq.s32.totalorder %s22, 1
      %p103 = por %p101, %p102
      %p104 = scmp.ne.s32.totalorder %s95, %s96
      %p105 = scmp.eq.s32.totalorder %s22, 0
      %p106 = por %p104, %p105
      %p107 = scmp.ne.s32.totalorder %s95, %s96
      %p108 = scmp.eq.s32.totalorder %s23, 1
      %p109 = por %p107, %p108
      %p111 = scmp.ne.s32.totalorder %s96, %s110
      %p112 = scmp.eq.s32.totalorder %s23, 0
      %p113 = por %p111, %p112
      %s115 = sadd.s32 %s114, 1
      %p118 = scmp.eq.s32.totalorder %s17, 1
      %p119 = scmp.ne.s32.totalorder %s114, %s116
      %p120 = scmp.eq.s32.totalorder %s17, 0
      %p121 = por %p119, %p120
      %p122 = scmp.ne.s32.totalorder %s114, %s116
      %p123 = scmp.eq.s32.totalorder %s22, 1
      %p124 = por %p122, %p123
      %p125 = scmp.ne.s32.totalorder %s116, %s117
      %p126 = scmp.eq.s32.totalorder %s22, 0
      %p127 = por %p125, %p126
      %p128 = scmp.ne.s32.totalorder %s116, %s117
      %p129 = scmp.eq.s32.totalorder %s23, 1
      %p130 = por %p128, %p129
      %p132 = scmp.ne.s32.totalorder %s117, %s131
      %p133 = scmp.eq.s32.totalorder %s23, 0
      %p134 = por %p132, %p133
      %s136 = sadd.s32 %s135, 1
      %p139 = scmp.eq.s32.totalorder %s17, 1
      %p140 = scmp.ne.s32.totalorder %s135, %s137
      %p141 = scmp.eq.s32.totalorder %s17, 0
      %p142 = por %p140, %p141
      %p143 = scmp.ne.s32.totalorder %s135, %s137
      %p144 = scmp.eq.s32.totalorder %s22, 1
      %p145 = por %p143, %p144
      %p146 = scmp.ne.s32.totalorder %s137, %s138
      %p147 = scmp.eq.s32.totalorder %s22, 0
      %p148 = por %p146, %p147
      %p149 = scmp.ne.s32.totalorder %s137, %s138
      %p150 = scmp.eq.s32.totalorder %s23, 1
      %p151 = por %p149, %p150
      %p153 = scmp.ne.s32.totalorder %s138, %s152
      %p154 = scmp.eq.s32.totalorder %s23, 0
      %p155 = por %p153, %p154
      %s156 = ssub.s32 %s17, %s24
      %p157 = scmp.eq.s32.totalorder %s156, 0
      %s159 = sadd.s32 %s158, 1
      %s160 = scalar_select %p157, %s158, %s159
      %p163 = pneg %p157
      %p164 = scmp.eq.s32.totalorder %s17, 1
      %p165 = por %p163, %p164
      %p166 = scmp.ne.s32.totalorder %s158, %s161
      %p167 = scmp.eq.s32.totalorder %s17, 0
      %p168 = por %p166, %p167
      %p169 = scmp.ne.s32.totalorder %s158, %s161
      %p170 = scmp.eq.s32.totalorder %s22, 1
      %p171 = por %p169, %p170
      %p172 = scmp.ne.s32.totalorder %s161, %s162
      %p173 = scmp.eq.s32.totalorder %s22, 0
      %p174 = por %p172, %p173
      %p175 = scmp.ne.s32.totalorder %s161, %s162
      %p176 = scmp.eq.s32.totalorder %s23, 1
      %p177 = por %p175, %p176
      %p179 = scmp.ne.s32.totalorder %s162, %s178
      %p180 = scmp.eq.s32.totalorder %s23, 0
      %p181 = por %p179, %p180
      %p182 = scmp.le.s32.totalorder 1, %s17
      %p183 = scmp.lt.s32.totalorder %s17, 3
      %p184 = pnand %p182, %p183
      %p185 = pneg %p184
      // Predicated region
      $region9: #{tpu_custom_call.1} parent=5 // pred_check
        _
      $region10: #{tpu_custom_call.1} parent=5 // pred_check_branch
        %187 = sbr.rel (%p184) target = $region12
      $region11: #{tpu_custom_call.1} parent=5 // pred_region
        %s188 = ssub.s32 %s17, 1
        // Predicated region
        $region13: #{tpu_custom_call.1} parent=11 // pred_check
          %p189 = pneg %p64
        $region14: #{tpu_custom_call.1} parent=11 // pred_check_branch
          %191 = sbr.rel (%p189) target = $region16
        $region15: #{tpu_custom_call.1} parent=11 // pred_region
          %193 = vsyncadd [#allocation3], 0
          %s194 = sshll.u32 %s1, 4
          %s195 = int_to_ptr.hbm [resolvable:$true] %s194
          %s196 = sshll.u32 [#allocation2], 4
          %s197 = int_to_ptr.vmem [resolvable:$true] %s196
          %202 = dma.hbm_to_vmem [thread:$0]  %s195, 128, %s197, [#allocation3], 64, 64, 4
        $region16: #{tpu_custom_call.1} parent=11 // pred_fallthru
          _
        // Predicated region
        $region17: #{tpu_custom_call.1} parent=11 // pred_check
          %p203 = pneg %p85
        $region18: #{tpu_custom_call.1} parent=11 // pred_check_branch
          %205 = sbr.rel (%p203) target = $region20
        $region19: #{tpu_custom_call.1} parent=11 // pred_region
          %207 = vsyncadd [#allocation6], 0
          %s208 = sshll.u32 %s2, 4
          %s209 = int_to_ptr.hbm [resolvable:$true] %s208
          %s210 = sshll.u32 [#allocation5], 4
          %s211 = int_to_ptr.vmem [resolvable:$true] %s210
          %216 = dma.hbm_to_vmem [thread:$0]  %s209, 4096, %s211, [#allocation6], 64, 64, 4
        $region20: #{tpu_custom_call.1} parent=11 // pred_fallthru
          _
        // Predicated region
        $region21: #{tpu_custom_call.1} parent=11 // pred_check
          %p217 = pneg %p106
        $region22: #{tpu_custom_call.1} parent=11 // pred_check_branch
          %219 = sbr.rel (%p217) target = $region24
        $region23: #{tpu_custom_call.1} parent=11 // pred_region
          _
        $region24: #{tpu_custom_call.1} parent=11 // pred_fallthru
          _
        // Predicated region
        $region25: #{tpu_custom_call.1} parent=11 // pred_check
          %p220 = pneg %p127
        $region26: #{tpu_custom_call.1} parent=11 // pred_check_branch
          %222 = sbr.rel (%p220) target = $region28
        $region27: #{tpu_custom_call.1} parent=11 // pred_region
          _
        $region28: #{tpu_custom_call.1} parent=11 // pred_fallthru
          _
        // Predicated region
        $region29: #{tpu_custom_call.1} parent=11 // pred_check
          %p223 = pneg %p148
        $region30: #{tpu_custom_call.1} parent=11 // pred_check_branch
          %225 = sbr.rel (%p223) target = $region32
        $region31: #{tpu_custom_call.1} parent=11 // pred_region
          _
        $region32: #{tpu_custom_call.1} parent=11 // pred_fallthru
          _
      $region12: #{tpu_custom_call.1} parent=5 // pred_fallthru
        _
      %p226 = scmp.lt.s32.totalorder %s17, 2
      // Predicated region
      $region33: #{tpu_custom_call.1} parent=5 // pred_check
        %p227 = pneg %p226
      $region34: #{tpu_custom_call.1} parent=5 // pred_check_branch
        %229 = sbr.rel (%p227) target = $region36
      $region35: #{tpu_custom_call.1} parent=5 // pred_region
        // Predicated region
        $region37: #{tpu_custom_call.1} parent=35 // pred_check
          %p230 = pneg %p37
        $region38: #{tpu_custom_call.1} parent=35 // pred_check_branch
          %232 = sbr.rel (%p230) target = $region40
        $region39: #{tpu_custom_call.1} parent=35 // pred_region
          %s233 = smul.u32 8, %s17
          %p234 = scmp.lt.s32.totalorder %s233, 15
          %s235 = scalar_select %p234, %s233, 15
          %s236 = smul.addr %s235, 8
          %s237 = scalar_lea.vmem %s0, %s236
          %s238 = smul.u32 8, %s17
        $region40: #{tpu_custom_call.1} parent=35 // pred_fallthru
          _
      $region36: #{tpu_custom_call.1} parent=5 // pred_fallthru
        _
      %p239 = scmp.le.s32.totalorder 1, %s17
      %p240 = scmp.lt.s32.totalorder %s17, 3
      %p241 = pnand %p239, %p240
      %p242 = pneg %p241
      // Predicated region
      $region41: #{tpu_custom_call.1} parent=5 // pred_check
        _
      $region42: #{tpu_custom_call.1} parent=5 // pred_check_branch
        %244 = sbr.rel (%p241) target = $region44
      $region43: #{tpu_custom_call.1} parent=5 // pred_region
        %s245 = ssub.s32 %s17, 1
        // Predicated region
        $region45: #{tpu_custom_call.1} parent=43 // pred_check
          %p246 = pneg %p64
        $region46: #{tpu_custom_call.1} parent=43 // pred_check_branch
          %248 = sbr.rel (%p246) target = $region48
        $region47: #{tpu_custom_call.1} parent=43 // pred_region
          %250 = dma.done [#allocation3], 128
        $region48: #{tpu_custom_call.1} parent=43 // pred_fallthru
          _
        // Predicated region
        $region49: #{tpu_custom_call.1} parent=43 // pred_check
          %p251 = pneg %p85
        $region50: #{tpu_custom_call.1} parent=43 // pred_check_branch
          %253 = sbr.rel (%p251) target = $region52
        $region51: #{tpu_custom_call.1} parent=43 // pred_region
          %255 = dma.done [#allocation6], 4096
        $region52: #{tpu_custom_call.1} parent=43 // pred_fallthru
          _
        %s256 = smul.u32 8, %s22
        %p257 = scmp.lt.s32.totalorder %s256, 15
        %s258 = scalar_select %p257, %s256, 15
        %s259 = smul.addr %s258, 8
        %s260 = scalar_lea.vmem %s0, %s259
        %p261 = pneg %p43
        %p262 = pneg %p40
        %p263 = pneg %p64
        %p264 = pneg %p61
        %p265 = pneg %p85
        %p266 = pneg %p82
        %p267 = pneg %p106
        %p268 = pneg %p103
        %p269 = pneg %p127
        %p270 = pneg %p124
        %p271 = pneg %p148
        %p272 = pneg %p145
        %p273 = pneg %p174
        %p274 = pneg %p171
        %s275 = sand.u32 %s161, 1
        %s276 = scalar_lea.sflag [#allocation4], %s275
        %s277 = sand.u32 %s161, 1
        %s278 = smul.addr %s277, 64
        %s279 = scalar_lea.vmem [#allocation7], %s278
        %s280 = smul.u32 8, %s22
        %p281 = scmp.lt.s32.totalorder %s280, 15
        %s282 = scalar_select %p281, %s280, 15
        %s283 = smul.addr %s282, 8
        %s284 = scalar_lea.vmem %s0, %s283
        %s285 = smul.u32 8, %s22
        %s286 = smul.u32 8, %s22
        %v288 = vld [vmem:[%s284] sm:$0xff]
        %v289 = vld [vmem:[%s284 + $0x8] sm:$0xff]
        %v290 = vld [vmem:[%s284 + $0x10] sm:$0xff]
        %v291 = vld [vmem:[%s284 + $0x18] sm:$0xff]
        %v292 = vld [vmem:[%s284 + $0x20] sm:$0xff]
        %v293 = vld [vmem:[%s284 + $0x28] sm:$0xff]
        %v294 = vld [vmem:[%s284 + $0x30] sm:$0xff]
        %v295 = vld [vmem:[%s284 + $0x38] sm:$0xff]
        %v296 = vld [vmem:[%s3] sm:$0x7]
        %v297 = vpack.c.bf16 %v289, %v288
        %v298 = vpack.c.bf16 %v291, %v290
        %v299 = vpack.c.bf16 %v293, %v292
        %v300 = vpack.c.bf16 %v295, %v294
        %v301 = vld [vmem:[#allocation2] sm:$0xf]
        %v302 = vld [vmem:[#allocation2 + $0x4] sm:$0xf]
        %v303 = vperm.slane %v296, 0
        %v306 = vunpack.c.l.b16 %v301
        %v307 = vunpack.c.l.b16 %v302
        %v308 = vpack.c.b16 %v307, %v306
        %vm310 = vcmask 130048
        %v312 = vsel %vm310, %v297, 0
        %v315 = vsel %vm310, %v298, 0
        %v318 = vsel %vm310, %v299, 0
        %v321 = vsel %vm310, %v300, 0
        %323 = vmatpush.bf16.msra.mxu0 0
        %324 = vmatpush.bf16.msra.mxu0 0
        %325 = vmatpush.bf16.msra.mxu0 0
        %326 = vmatpush.bf16.msra.mxu0 0
        %327 = vmatpush.bf16.msra.mxu0 0
        %328 = vmatpush.bf16.msra.mxu0 0
        %329 = vmatpush.bf16.msra.mxu0 0
        %330 = vmatpush.bf16.msra.mxu0 %v308
        %331 = vmatmul.bf16.gmra.mxu0 %v312
        %v332 = vpop.f32.mrf.mxu0
        %v333 = vadd.f32 %v303, %v332
        %v334 = vpop.f32.mrf.mxu0
        %v335 = vadd.f32 %v303, %v334
        %336 = vmatmul.bf16.gmra.mxu0 %v315
        %v337 = vpop.f32.mrf.mxu0
        %v338 = vadd.f32 %v303, %v337
        %v339 = vpop.f32.mrf.mxu0
        %v340 = vadd.f32 %v303, %v339
        %341 = vmatmul.bf16.gmra.mxu0 %v318
        %v342 = vpop.f32.mrf.mxu0
        %v343 = vadd.f32 %v303, %v342
        %v344 = vpop.f32.mrf.mxu0
        %v345 = vadd.f32 %v303, %v344
        %346 = vmatmul.bf16.gmra.mxu0 %v321
        %v347 = vpop.f32.mrf.mxu0
        %v348 = vadd.f32 %v303, %v347
        %v349 = vpop.f32.mrf.mxu0
        %v350 = vadd.f32 %v303, %v349
        %351 = vdwg.mxu0
        %352 = vadd.xlane.f32.xlu0 %v333
        %v353 = vpop.xlane.xlu0 %352
        %354 = vadd.xlane.f32.xlu0 %v335
        %v355 = vpop.xlane.xlu0 %354
        %356 = vadd.xlane.f32.xlu0 %v338
        %v357 = vpop.xlane.xlu0 %356
        %358 = vadd.xlane.f32.xlu0 %v340
        %v359 = vpop.xlane.xlu0 %358
        %360 = vadd.xlane.f32.xlu0 %v343
        %v361 = vpop.xlane.xlu0 %360
        %362 = vadd.xlane.f32.xlu0 %v345
        %v363 = vpop.xlane.xlu0 %362
        %364 = vadd.xlane.f32.xlu0 %v348
        %v365 = vpop.xlane.xlu0 %364
        %366 = vadd.xlane.f32.xlu0 %v350
        %v367 = vpop.xlane.xlu0 %366
        %v368 = vrcp.pop 128.0
        %v369 = vmul.f32 128.0, %v368
        %v370 = vsub.f32 1.0, %v369
        %v371 = vmul.f32 %v368, %v370
        %v372 = vadd.f32 %v368, %v371
        %vm373 = vweird.f32 %v368
        %v374 = vsel %vm373, %v368, %v372
        %v375 = vmul.f32 %v353, %v374
        %v376 = vmul.f32 %v355, %v374
        %v377 = vmul.f32 %v357, %v374
        %v378 = vmul.f32 %v359, %v374
        %v379 = vmul.f32 %v361, %v374
        %v380 = vmul.f32 %v363, %v374
        %v381 = vmul.f32 %v365, %v374
        %v382 = vmul.f32 %v367, %v374
        %v383 = vsub.f32 %v333, %v375
        %v384 = vsub.f32 %v335, %v376
        %v385 = vsub.f32 %v338, %v377
        %v386 = vsub.f32 %v340, %v378
        %v387 = vsub.f32 %v343, %v379
        %v388 = vsub.f32 %v345, %v380
        %v389 = vsub.f32 %v348, %v381
        %v390 = vsub.f32 %v350, %v382
        %v391 = vmul.f32 %v383, %v383
        %v392 = vmul.f32 %v384, %v384
        %v393 = vmul.f32 %v385, %v385
        %v394 = vmul.f32 %v386, %v386
        %v395 = vmul.f32 %v387, %v387
        %v396 = vmul.f32 %v388, %v388
        %v397 = vmul.f32 %v389, %v389
        %v398 = vmul.f32 %v390, %v390
        %399 = vadd.xlane.f32.xlu0 %v391
        %v400 = vpop.xlane.xlu0 %399
        %401 = vadd.xlane.f32.xlu0 %v392
        %v402 = vpop.xlane.xlu0 %401
        %403 = vadd.xlane.f32.xlu0 %v393
        %v404 = vpop.xlane.xlu0 %403
        %405 = vadd.xlane.f32.xlu0 %v394
        %v406 = vpop.xlane.xlu0 %405
        %407 = vadd.xlane.f32.xlu0 %v395
        %v408 = vpop.xlane.xlu0 %407
        %409 = vadd.xlane.f32.xlu0 %v396
        %v410 = vpop.xlane.xlu0 %409
        %411 = vadd.xlane.f32.xlu0 %v397
        %v412 = vpop.xlane.xlu0 %411
        %413 = vadd.xlane.f32.xlu0 %v398
        %v414 = vpop.xlane.xlu0 %413
        %v415 = vmul.f32 %v400, %v374
        %v416 = vmul.f32 %v402, %v374
        %v417 = vmul.f32 %v404, %v374
        %v418 = vmul.f32 %v406, %v374
        %v419 = vmul.f32 %v408, %v374
        %v420 = vmul.f32 %v410, %v374
        %v421 = vmul.f32 %v412, %v374
        %v422 = vmul.f32 %v414, %v374
        %v423 = vadd.f32 %v415, 1e-05
        %v424 = vadd.f32 %v416, 1e-05
        %v425 = vadd.f32 %v417, 1e-05
        %v426 = vadd.f32 %v418, 1e-05
        %v427 = vadd.f32 %v419, 1e-05
        %v428 = vadd.f32 %v420, 1e-05
        %v429 = vadd.f32 %v421, 1e-05
        %v430 = vadd.f32 %v422, 1e-05
        %v431 = vrsqrt.pop %v423
        %v432 = vmul.f32 %v431, %v423
        %v433 = vmul.f32 %v432, %v431
        %v434 = vmul.f32 0.5, %v433
        %v435 = vsub.f32 1.5, %v434
        %v436 = vmul.f32 %v431, %v435
        %vm437 = vweird.f32 %v423
        %vm438 = vweird.f32 %v431
        %vm439 = vmor %vm437, %vm438
        %v440 = vsel %vm439, %v431, %v436
        %v441 = vrsqrt.pop %v424
        %v442 = vmul.f32 %v441, %v424
        %v443 = vmul.f32 %v442, %v441
        %v444 = vmul.f32 0.5, %v443
        %v445 = vsub.f32 1.5, %v444
        %v446 = vmul.f32 %v441, %v445
        %vm447 = vweird.f32 %v424
        %vm448 = vweird.f32 %v441
        %vm449 = vmor %vm447, %vm448
        %v450 = vsel %vm449, %v441, %v446
        %v451 = vrsqrt.pop %v425
        %v452 = vmul.f32 %v451, %v425
        %v453 = vmul.f32 %v452, %v451
        %v454 = vmul.f32 0.5, %v453
        %v455 = vsub.f32 1.5, %v454
        %v456 = vmul.f32 %v451, %v455
        %vm457 = vweird.f32 %v425
        %vm458 = vweird.f32 %v451
        %vm459 = vmor %vm457, %vm458
        %v460 = vsel %vm459, %v451, %v456
        %v461 = vrsqrt.pop %v426
        %v462 = vmul.f32 %v461, %v426
        %v463 = vmul.f32 %v462, %v461
        %v464 = vmul.f32 0.5, %v463
        %v465 = vsub.f32 1.5, %v464
        %v466 = vmul.f32 %v461, %v465
        %vm467 = vweird.f32 %v426
        %vm468 = vweird.f32 %v461
        %vm469 = vmor %vm467, %vm468
        %v470 = vsel %vm469, %v461, %v466
        %v471 = vrsqrt.pop %v427
        %v472 = vmul.f32 %v471, %v427
        %v473 = vmul.f32 %v472, %v471
        %v474 = vmul.f32 0.5, %v473
        %v475 = vsub.f32 1.5, %v474
        %v476 = vmul.f32 %v471, %v475
        %vm477 = vweird.f32 %v427
        %vm478 = vweird.f32 %v471
        %vm479 = vmor %vm477, %vm478
        %v480 = vsel %vm479, %v471, %v476
        %v481 = vrsqrt.pop %v428
        %v482 = vmul.f32 %v481, %v428
        %v483 = vmul.f32 %v482, %v481
        %v484 = vmul.f32 0.5, %v483
        %v485 = vsub.f32 1.5, %v484
        %v486 = vmul.f32 %v481, %v485
        %vm487 = vweird.f32 %v428
        %vm488 = vweird.f32 %v481
        %vm489 = vmor %vm487, %vm488
        %v490 = vsel %vm489, %v481, %v486
        %v491 = vrsqrt.pop %v429
        %v492 = vmul.f32 %v491, %v429
        %v493 = vmul.f32 %v492, %v491
        %v494 = vmul.f32 0.5, %v493
        %v495 = vsub.f32 1.5, %v494
        %v496 = vmul.f32 %v491, %v495
        %vm497 = vweird.f32 %v429
        %vm498 = vweird.f32 %v491
        %vm499 = vmor %vm497, %vm498
        %v500 = vsel %vm499, %v491, %v496
        %v501 = vrsqrt.pop %v430
        %v502 = vmul.f32 %v501, %v430
        %v503 = vmul.f32 %v502, %v501
        %v504 = vmul.f32 0.5, %v503
        %v505 = vsub.f32 1.5, %v504
        %v506 = vmul.f32 %v501, %v505
        %vm507 = vweird.f32 %v430
        %vm508 = vweird.f32 %v501
        %vm509 = vmor %vm507, %vm508
        %v510 = vsel %vm509, %v501, %v506
        %v511 = vmul.f32 %v383, %v440
        %v512 = vmul.f32 %v384, %v450
        %v513 = vmul.f32 %v385, %v460
        %v514 = vmul.f32 %v386, %v470
        %v515 = vmul.f32 %v387, %v480
        %v516 = vmul.f32 %v388, %v490
        %v517 = vmul.f32 %v389, %v500
        %v518 = vmul.f32 %v390, %v510
        %v519 = vperm.slane %v296, 1
        %v520 = vmul.f32 %v511, %v519
        %v521 = vmul.f32 %v512, %v519
        %v522 = vmul.f32 %v513, %v519
        %v523 = vmul.f32 %v514, %v519
        %v524 = vmul.f32 %v515, %v519
        %v525 = vmul.f32 %v516, %v519
        %v526 = vmul.f32 %v517, %v519
        %v527 = vmul.f32 %v518, %v519
        %v528 = vperm.slane %v296, 2
        %v529 = vadd.f32 %v520, %v528
        %v530 = vadd.f32 %v521, %v528
        %v531 = vadd.f32 %v522, %v528
        %v532 = vadd.f32 %v523, %v528
        %v533 = vadd.f32 %v524, %v528
        %v534 = vadd.f32 %v525, %v528
        %v535 = vadd.f32 %v526, %v528
        %v536 = vadd.f32 %v527, %v528
        %v537 = vmax.f32 %v529, 0.0
        %v538 = vmax.f32 %v530, 0.0
        %v539 = vmax.f32 %v531, 0.0
        %v540 = vmax.f32 %v532, 0.0
        %v541 = vmax.f32 %v533, 0.0
        %v542 = vmax.f32 %v534, 0.0
        %v543 = vmax.f32 %v535, 0.0
        %v544 = vmax.f32 %v536, 0.0
        %v545 = vsub.f32 0.0, %v529
        %v546 = vsub.f32 0.0, %v530
        %v547 = vsub.f32 0.0, %v531
        %v548 = vsub.f32 0.0, %v532
        %v549 = vsub.f32 0.0, %v533
        %v550 = vsub.f32 0.0, %v534
        %v551 = vsub.f32 0.0, %v535
        %v552 = vsub.f32 0.0, %v536
        %v553 = vmax.f32 %v545, 0.0
        %v554 = vmax.f32 %v546, 0.0
        %v555 = vmax.f32 %v547, 0.0
        %v556 = vmax.f32 %v548, 0.0
        %v557 = vmax.f32 %v549, 0.0
        %v558 = vmax.f32 %v550, 0.0
        %v559 = vmax.f32 %v551, 0.0
        %v560 = vmax.f32 %v552, 0.0
        %v561 = vld [vmem:[#allocation5] sm:$0xf]
        %v562 = vld [vmem:[#allocation5 + $0x4] sm:$0xf]
        %v563 = vld [vmem:[#allocation5 + $0x8] sm:$0xf]
        %v564 = vld [vmem:[#allocation5 + $0xc] sm:$0xf]
        %v565 = vld [vmem:[#allocation5 + $0x10] sm:$0xf]
        %v566 = vld [vmem:[#allocation5 + $0x14] sm:$0xf]
        %v567 = vld [vmem:[#allocation5 + $0x18] sm:$0xf]
        %v568 = vld [vmem:[#allocation5 + $0x1c] sm:$0xf]
        %v569 = vld [vmem:[#allocation5 + $0x20] sm:$0xf]
        %v570 = vld [vmem:[#allocation5 + $0x24] sm:$0xf]
        %v571 = vld [vmem:[#allocation5 + $0x28] sm:$0xf]
        %v572 = vld [vmem:[#allocation5 + $0x2c] sm:$0xf]
        %v573 = vld [vmem:[#allocation5 + $0x30] sm:$0xf]
        %v574 = vld [vmem:[#allocation5 + $0x34] sm:$0xf]
        %v575 = vld [vmem:[#allocation5 + $0x38] sm:$0xf]
        %v576 = vld [vmem:[#allocation5 + $0x3c] sm:$0xf]
        %v577 = vld [vmem:[#allocation5 + $0x40] sm:$0xf]
        %v578 = vld [vmem:[#allocation5 + $0x44] sm:$0xf]
        %v579 = vld [vmem:[#allocation5 + $0x48] sm:$0xf]
        %v580 = vld [vmem:[#allocation5 + $0x4c] sm:$0xf]
        %v581 = vld [vmem:[#allocation5 + $0x50] sm:$0xf]
        %v582 = vld [vmem:[#allocation5 + $0x54] sm:$0xf]
        %v583 = vld [vmem:[#allocation5 + $0x58] sm:$0xf]
        %v584 = vld [vmem:[#allocation5 + $0x5c] sm:$0xf]
        %v585 = vld [vmem:[#allocation5 + $0x60] sm:$0xf]
        %v586 = vld [vmem:[#allocation5 + $0x64] sm:$0xf]
        %v587 = vld [vmem:[#allocation5 + $0x68] sm:$0xf]
        %v588 = vld [vmem:[#allocation5 + $0x6c] sm:$0xf]
        %v589 = vld [vmem:[#allocation5 + $0x70] sm:$0xf]
        %v590 = vld [vmem:[#allocation5 + $0x74] sm:$0xf]
        %v591 = vld [vmem:[#allocation5 + $0x78] sm:$0xf]
        %v592 = vld [vmem:[#allocation5 + $0x7c] sm:$0xf]
        %s593 = scalar_lea.vmem %s3, 4
        %v594 = vld [vmem:[%s593] sm:$0x7]
        %v595 = vpack.c.bf16 %v538, %v537
        %v596 = vpack.c.bf16 %v540, %v539
        %v597 = vpack.c.bf16 %v542, %v541
        %v598 = vpack.c.bf16 %v544, %v543
        %v599 = vpack.c.bf16 %v554, %v553
        %v600 = vpack.c.bf16 %v556, %v555
        %v601 = vpack.c.bf16 %v558, %v557
        %v602 = vpack.c.bf16 %v560, %v559
        %v619 = vunpack.c.l.b16 %v577
        %v620 = vunpack.c.l.b16 %v578
        %v621 = vunpack.c.l.b16 %v579
        %v622 = vunpack.c.l.b16 %v580
        %v623 = vunpack.c.l.b16 %v581
        %v624 = vunpack.c.l.b16 %v582
        %v625 = vunpack.c.l.b16 %v583
        %v626 = vunpack.c.l.b16 %v584
        %v627 = vunpack.c.l.b16 %v585
        %v628 = vunpack.c.l.b16 %v586
        %v629 = vunpack.c.l.b16 %v587
        %v630 = vunpack.c.l.b16 %v588
        %v631 = vunpack.c.l.b16 %v589
        %v632 = vunpack.c.l.b16 %v590
        %v633 = vunpack.c.l.b16 %v591
        %v634 = vunpack.c.l.b16 %v592
        %v635 = vpack.c.b16 %v620, %v619
        %v636 = vpack.c.b16 %v622, %v621
        %v637 = vpack.c.b16 %v624, %v623
        %v638 = vpack.c.b16 %v626, %v625
        %v639 = vpack.c.b16 %v628, %v627
        %v640 = vpack.c.b16 %v630, %v629
        %v641 = vpack.c.b16 %v632, %v631
        %v642 = vpack.c.b16 %v634, %v633
        %651 = vmatpush.bf16.msra.mxu0 %v642
        %652 = vmatpush.bf16.msra.mxu0 %v641
        %653 = vmatpush.bf16.msra.mxu0 %v640
        %654 = vmatpush.bf16.msra.mxu0 %v639
        %655 = vmatpush.bf16.msra.mxu0 %v638
        %656 = vmatpush.bf16.msra.mxu0 %v637
        %657 = vmatpush.bf16.msra.mxu0 %v636
        %658 = vmatpush.bf16.msra.mxu0 %v635
        %659 = vmatmul.bf16.gmra.mxu0 %v599
        %v660 = vpop.f32.mrf.mxu0
        %v661 = vadd.f32 0.0, %v660
        %v662 = vpop.f32.mrf.mxu0
        %v663 = vadd.f32 0.0, %v662
        %664 = vmatmul.bf16.gmra.mxu0 %v600
        %v665 = vpop.f32.mrf.mxu0
        %v666 = vadd.f32 0.0, %v665
        %v667 = vpop.f32.mrf.mxu0
        %v668 = vadd.f32 0.0, %v667
        %669 = vmatmul.bf16.gmra.mxu0 %v601
        %v670 = vpop.f32.mrf.mxu0
        %v671 = vadd.f32 0.0, %v670
        %v672 = vpop.f32.mrf.mxu0
        %v673 = vadd.f32 0.0, %v672
        %674 = vmatmul.bf16.gmra.mxu0 %v602
        %v675 = vpop.f32.mrf.mxu0
        %v676 = vadd.f32 0.0, %v675
        %v677 = vpop.f32.mrf.mxu0
        %v678 = vadd.f32 0.0, %v677
        %679 = vdwg.mxu0
        %v696 = vunpack.c.l.b16 %v561
        %v697 = vunpack.c.l.b16 %v562
        %v698 = vunpack.c.l.b16 %v563
        %v699 = vunpack.c.l.b16 %v564
        %v700 = vunpack.c.l.b16 %v565
        %v701 = vunpack.c.l.b16 %v566
        %v702 = vunpack.c.l.b16 %v567
        %v703 = vunpack.c.l.b16 %v568
        %v704 = vunpack.c.l.b16 %v569
        %v705 = vunpack.c.l.b16 %v570
        %v706 = vunpack.c.l.b16 %v571
        %v707 = vunpack.c.l.b16 %v572
        %v708 = vunpack.c.l.b16 %v573
        %v709 = vunpack.c.l.b16 %v574
        %v710 = vunpack.c.l.b16 %v575
        %v711 = vunpack.c.l.b16 %v576
        %v712 = vpack.c.b16 %v697, %v696
        %v713 = vpack.c.b16 %v699, %v698
        %v714 = vpack.c.b16 %v701, %v700
        %v715 = vpack.c.b16 %v703, %v702
        %v716 = vpack.c.b16 %v705, %v704
        %v717 = vpack.c.b16 %v707, %v706
        %v718 = vpack.c.b16 %v709, %v708
        %v719 = vpack.c.b16 %v711, %v710
        %728 = vmatpush.bf16.msra.mxu0 %v719
        %729 = vmatpush.bf16.msra.mxu0 %v718
        %730 = vmatpush.bf16.msra.mxu0 %v717
        %731 = vmatpush.bf16.msra.mxu0 %v716
        %732 = vmatpush.bf16.msra.mxu0 %v715
        %733 = vmatpush.bf16.msra.mxu0 %v714
        %734 = vmatpush.bf16.msra.mxu0 %v713
        %735 = vmatpush.bf16.msra.mxu0 %v712
        %736 = vmatmul.bf16.gmra.mxu0 %v595
        %v737 = vpop.f32.mrf.mxu0
        %v738 = vadd.f32 %v661, %v737
        %v739 = vpop.f32.mrf.mxu0
        %v740 = vadd.f32 %v663, %v739
        %741 = vmatmul.bf16.gmra.mxu0 %v596
        %v742 = vpop.f32.mrf.mxu0
        %v743 = vadd.f32 %v666, %v742
        %v744 = vpop.f32.mrf.mxu0
        %v745 = vadd.f32 %v668, %v744
        %746 = vmatmul.bf16.gmra.mxu0 %v597
        %v747 = vpop.f32.mrf.mxu0
        %v748 = vadd.f32 %v671, %v747
        %v749 = vpop.f32.mrf.mxu0
        %v750 = vadd.f32 %v673, %v749
        %751 = vmatmul.bf16.gmra.mxu0 %v598
        %v752 = vpop.f32.mrf.mxu0
        %v753 = vadd.f32 %v676, %v752
        %v754 = vpop.f32.mrf.mxu0
        %v755 = vadd.f32 %v678, %v754
        %756 = vdwg.mxu0
        %v757 = vperm.slane %v594, 0
        %v758 = vadd.f32 %v738, %v757
        %v759 = vadd.f32 %v740, %v757
        %v760 = vadd.f32 %v743, %v757
        %v761 = vadd.f32 %v745, %v757
        %v762 = vadd.f32 %v748, %v757
        %v763 = vadd.f32 %v750, %v757
        %v764 = vadd.f32 %v753, %v757
        %v765 = vadd.f32 %v755, %v757
        %766 = vadd.xlane.f32.xlu0 %v758
        %v767 = vpop.xlane.xlu0 %766
        %768 = vadd.xlane.f32.xlu0 %v759
        %v769 = vpop.xlane.xlu0 %768
        %770 = vadd.xlane.f32.xlu0 %v760
        %v771 = vpop.xlane.xlu0 %770
        %772 = vadd.xlane.f32.xlu0 %v761
        %v773 = vpop.xlane.xlu0 %772
        %774 = vadd.xlane.f32.xlu0 %v762
        %v775 = vpop.xlane.xlu0 %774
        %776 = vadd.xlane.f32.xlu0 %v763
        %v777 = vpop.xlane.xlu0 %776
        %778 = vadd.xlane.f32.xlu0 %v764
        %v779 = vpop.xlane.xlu0 %778
        %780 = vadd.xlane.f32.xlu0 %v765
        %v781 = vpop.xlane.xlu0 %780
        %v782 = vmul.f32 %v767, %v374
        %v783 = vmul.f32 %v769, %v374
        %v784 = vmul.f32 %v771, %v374
        %v785 = vmul.f32 %v773, %v374
        %v786 = vmul.f32 %v775, %v374
        %v787 = vmul.f32 %v777, %v374
        %v788 = vmul.f32 %v779, %v374
        %v789 = vmul.f32 %v781, %v374
        %v790 = vsub.f32 %v758, %v782
        %v791 = vsub.f32 %v759, %v783
        %v792 = vsub.f32 %v760, %v784
        %v793 = vsub.f32 %v761, %v785
        %v794 = vsub.f32 %v762, %v786
        %v795 = vsub.f32 %v763, %v787
        %v796 = vsub.f32 %v764, %v788
        %v797 = vsub.f32 %v765, %v789
        %v798 = vmul.f32 %v790, %v790
        %v799 = vmul.f32 %v791, %v791
        %v800 = vmul.f32 %v792, %v792
        %v801 = vmul.f32 %v793, %v793
        %v802 = vmul.f32 %v794, %v794
        %v803 = vmul.f32 %v795, %v795
        %v804 = vmul.f32 %v796, %v796
        %v805 = vmul.f32 %v797, %v797
        %806 = vadd.xlane.f32.xlu0 %v798
        %v807 = vpop.xlane.xlu0 %806
        %808 = vadd.xlane.f32.xlu0 %v799
        %v809 = vpop.xlane.xlu0 %808
        %810 = vadd.xlane.f32.xlu0 %v800
        %v811 = vpop.xlane.xlu0 %810
        %812 = vadd.xlane.f32.xlu0 %v801
        %v813 = vpop.xlane.xlu0 %812
        %814 = vadd.xlane.f32.xlu0 %v802
        %v815 = vpop.xlane.xlu0 %814
        %816 = vadd.xlane.f32.xlu0 %v803
        %v817 = vpop.xlane.xlu0 %816
        %818 = vadd.xlane.f32.xlu0 %v804
        %v819 = vpop.xlane.xlu0 %818
        %820 = vadd.xlane.f32.xlu0 %v805
        %v821 = vpop.xlane.xlu0 %820
        %v822 = vmul.f32 %v807, %v374
        %v823 = vmul.f32 %v809, %v374
        %v824 = vmul.f32 %v811, %v374
        %v825 = vmul.f32 %v813, %v374
        %v826 = vmul.f32 %v815, %v374
        %v827 = vmul.f32 %v817, %v374
        %v828 = vmul.f32 %v819, %v374
        %v829 = vmul.f32 %v821, %v374
        %v830 = vadd.f32 %v822, 1e-05
        %v831 = vadd.f32 %v823, 1e-05
        %v832 = vadd.f32 %v824, 1e-05
        %v833 = vadd.f32 %v825, 1e-05
        %v834 = vadd.f32 %v826, 1e-05
        %v835 = vadd.f32 %v827, 1e-05
        %v836 = vadd.f32 %v828, 1e-05
        %v837 = vadd.f32 %v829, 1e-05
        %v838 = vrsqrt.pop %v830
        %v839 = vmul.f32 %v838, %v830
        %v840 = vmul.f32 %v839, %v838
        %v841 = vmul.f32 0.5, %v840
        %v842 = vsub.f32 1.5, %v841
        %v843 = vmul.f32 %v838, %v842
        %vm844 = vweird.f32 %v830
        %vm845 = vweird.f32 %v838
        %vm846 = vmor %vm844, %vm845
        %v847 = vsel %vm846, %v838, %v843
        %v848 = vrsqrt.pop %v831
        %v849 = vmul.f32 %v848, %v831
        %v850 = vmul.f32 %v849, %v848
        %v851 = vmul.f32 0.5, %v850
        %v852 = vsub.f32 1.5, %v851
        %v853 = vmul.f32 %v848, %v852
        %vm854 = vweird.f32 %v831
        %vm855 = vweird.f32 %v848
        %vm856 = vmor %vm854, %vm855
        %v857 = vsel %vm856, %v848, %v853
        %v858 = vrsqrt.pop %v832
        %v859 = vmul.f32 %v858, %v832
        %v860 = vmul.f32 %v859, %v858
        %v861 = vmul.f32 0.5, %v860
        %v862 = vsub.f32 1.5, %v861
        %v863 = vmul.f32 %v858, %v862
        %vm864 = vweird.f32 %v832
        %vm865 = vweird.f32 %v858
        %vm866 = vmor %vm864, %vm865
        %v867 = vsel %vm866, %v858, %v863
        %v868 = vrsqrt.pop %v833
        %v869 = vmul.f32 %v868, %v833
        %v870 = vmul.f32 %v869, %v868
        %v871 = vmul.f32 0.5, %v870
        %v872 = vsub.f32 1.5, %v871
        %v873 = vmul.f32 %v868, %v872
        %vm874 = vweird.f32 %v833
        %vm875 = vweird.f32 %v868
        %vm876 = vmor %vm874, %vm875
        %v877 = vsel %vm876, %v868, %v873
        %v878 = vrsqrt.pop %v834
        %v879 = vmul.f32 %v878, %v834
        %v880 = vmul.f32 %v879, %v878
        %v881 = vmul.f32 0.5, %v880
        %v882 = vsub.f32 1.5, %v881
        %v883 = vmul.f32 %v878, %v882
        %vm884 = vweird.f32 %v834
        %vm885 = vweird.f32 %v878
        %vm886 = vmor %vm884, %vm885
        %v887 = vsel %vm886, %v878, %v883
        %v888 = vrsqrt.pop %v835
        %v889 = vmul.f32 %v888, %v835
        %v890 = vmul.f32 %v889, %v888
        %v891 = vmul.f32 0.5, %v890
        %v892 = vsub.f32 1.5, %v891
        %v893 = vmul.f32 %v888, %v892
        %vm894 = vweird.f32 %v835
        %vm895 = vweird.f32 %v888
        %vm896 = vmor %vm894, %vm895
        %v897 = vsel %vm896, %v888, %v893
        %v898 = vrsqrt.pop %v836
        %v899 = vmul.f32 %v898, %v836
        %v900 = vmul.f32 %v899, %v898
        %v901 = vmul.f32 0.5, %v900
        %v902 = vsub.f32 1.5, %v901
        %v903 = vmul.f32 %v898, %v902
        %vm904 = vweird.f32 %v836
        %vm905 = vweird.f32 %v898
        %vm906 = vmor %vm904, %vm905
        %v907 = vsel %vm906, %v898, %v903
        %v908 = vrsqrt.pop %v837
        %v909 = vmul.f32 %v908, %v837
        %v910 = vmul.f32 %v909, %v908
        %v911 = vmul.f32 0.5, %v910
        %v912 = vsub.f32 1.5, %v911
        %v913 = vmul.f32 %v908, %v912
        %vm914 = vweird.f32 %v837
        %vm915 = vweird.f32 %v908
        %vm916 = vmor %vm914, %vm915
        %v917 = vsel %vm916, %v908, %v913
        %v918 = vmul.f32 %v790, %v847
        %v919 = vmul.f32 %v791, %v857
        %v920 = vmul.f32 %v792, %v867
        %v921 = vmul.f32 %v793, %v877
        %v922 = vmul.f32 %v794, %v887
        %v923 = vmul.f32 %v795, %v897
        %v924 = vmul.f32 %v796, %v907
        %v925 = vmul.f32 %v797, %v917
        %v926 = vperm.slane %v594, 1
        %v927 = vmul.f32 %v918, %v926
        %v928 = vmul.f32 %v919, %v926
        %v929 = vmul.f32 %v920, %v926
        %v930 = vmul.f32 %v921, %v926
        %v931 = vmul.f32 %v922, %v926
        %v932 = vmul.f32 %v923, %v926
        %v933 = vmul.f32 %v924, %v926
        %v934 = vmul.f32 %v925, %v926
        %v935 = vperm.slane %v594, 2
        %v936 = vadd.f32 %v927, %v935
        %v937 = vadd.f32 %v928, %v935
        %v938 = vadd.f32 %v929, %v935
        %v939 = vadd.f32 %v930, %v935
        %v940 = vadd.f32 %v931, %v935
        %v941 = vadd.f32 %v932, %v935
        %v942 = vadd.f32 %v933, %v935
        %v943 = vadd.f32 %v934, %v935
        %v944 = vmax.f32 %v936, 0.0
        %v945 = vmax.f32 %v937, 0.0
        %v946 = vmax.f32 %v938, 0.0
        %v947 = vmax.f32 %v939, 0.0
        %v948 = vmax.f32 %v940, 0.0
        %v949 = vmax.f32 %v941, 0.0
        %v950 = vmax.f32 %v942, 0.0
        %v951 = vmax.f32 %v943, 0.0
        %v952 = vsub.f32 0.0, %v936
        %v953 = vsub.f32 0.0, %v937
        %v954 = vsub.f32 0.0, %v938
        %v955 = vsub.f32 0.0, %v939
        %v956 = vsub.f32 0.0, %v940
        %v957 = vsub.f32 0.0, %v941
        %v958 = vsub.f32 0.0, %v942
        %v959 = vsub.f32 0.0, %v943
        %v960 = vmax.f32 %v952, 0.0
        %v961 = vmax.f32 %v953, 0.0
        %v962 = vmax.f32 %v954, 0.0
        %v963 = vmax.f32 %v955, 0.0
        %v964 = vmax.f32 %v956, 0.0
        %v965 = vmax.f32 %v957, 0.0
        %v966 = vmax.f32 %v958, 0.0
        %v967 = vmax.f32 %v959, 0.0
        %s968 = scalar_lea.vmem [#allocation5], 128
        %v969 = vld [vmem:[%s968] sm:$0xf]
        %v970 = vld [vmem:[%s968 + $0x4] sm:$0xf]
        %v971 = vld [vmem:[%s968 + $0x8] sm:$0xf]
        %v972 = vld [vmem:[%s968 + $0xc] sm:$0xf]
        %v973 = vld [vmem:[%s968 + $0x10] sm:$0xf]
        %v974 = vld [vmem:[%s968 + $0x14] sm:$0xf]
        %v975 = vld [vmem:[%s968 + $0x18] sm:$0xf]
        %v976 = vld [vmem:[%s968 + $0x1c] sm:$0xf]
        %v977 = vld [vmem:[%s968 + $0x20] sm:$0xf]
        %v978 = vld [vmem:[%s968 + $0x24] sm:$0xf]
        %v979 = vld [vmem:[%s968 + $0x28] sm:$0xf]
        %v980 = vld [vmem:[%s968 + $0x2c] sm:$0xf]
        %v981 = vld [vmem:[%s968 + $0x30] sm:$0xf]
        %v982 = vld [vmem:[%s968 + $0x34] sm:$0xf]
        %v983 = vld [vmem:[%s968 + $0x38] sm:$0xf]
        %v984 = vld [vmem:[%s968 + $0x3c] sm:$0xf]
        %v985 = vld [vmem:[%s968 + $0x40] sm:$0xf]
        %v986 = vld [vmem:[%s968 + $0x44] sm:$0xf]
        %v987 = vld [vmem:[%s968 + $0x48] sm:$0xf]
        %v988 = vld [vmem:[%s968 + $0x4c] sm:$0xf]
        %v989 = vld [vmem:[%s968 + $0x50] sm:$0xf]
        %v990 = vld [vmem:[%s968 + $0x54] sm:$0xf]
        %v991 = vld [vmem:[%s968 + $0x58] sm:$0xf]
        %v992 = vld [vmem:[%s968 + $0x5c] sm:$0xf]
        %v993 = vld [vmem:[%s968 + $0x60] sm:$0xf]
        %v994 = vld [vmem:[%s968 + $0x64] sm:$0xf]
        %v995 = vld [vmem:[%s968 + $0x68] sm:$0xf]
        %v996 = vld [vmem:[%s968 + $0x6c] sm:$0xf]
        %v997 = vld [vmem:[%s968 + $0x70] sm:$0xf]
        %v998 = vld [vmem:[%s968 + $0x74] sm:$0xf]
        %v999 = vld [vmem:[%s968 + $0x78] sm:$0xf]
        %v1000 = vld [vmem:[%s968 + $0x7c] sm:$0xf]
        %s1001 = scalar_lea.vmem %s3, 8
        %v1002 = vld [vmem:[%s1001] sm:$0x7]
        %v1003 = vpack.c.bf16 %v945, %v944
        %v1004 = vpack.c.bf16 %v947, %v946
        %v1005 = vpack.c.bf16 %v949, %v948
        %v1006 = vpack.c.bf16 %v951, %v950
        %v1007 = vpack.c.bf16 %v961, %v960
        %v1008 = vpack.c.bf16 %v963, %v962
        %v1009 = vpack.c.bf16 %v965, %v964
        %v1010 = vpack.c.bf16 %v967, %v966
        %v1027 = vunpack.c.l.b16 %v985
        %v1028 = vunpack.c.l.b16 %v986
        %v1029 = vunpack.c.l.b16 %v987
        %v1030 = vunpack.c.l.b16 %v988
        %v1031 = vunpack.c.l.b16 %v989
        %v1032 = vunpack.c.l.b16 %v990
        %v1033 = vunpack.c.l.b16 %v991
        %v1034 = vunpack.c.l.b16 %v992
        %v1035 = vunpack.c.l.b16 %v993
        %v1036 = vunpack.c.l.b16 %v994
        %v1037 = vunpack.c.l.b16 %v995
        %v1038 = vunpack.c.l.b16 %v996
        %v1039 = vunpack.c.l.b16 %v997
        %v1040 = vunpack.c.l.b16 %v998
        %v1041 = vunpack.c.l.b16 %v999
        %v1042 = vunpack.c.l.b16 %v1000
        %v1043 = vpack.c.b16 %v1028, %v1027
        %v1044 = vpack.c.b16 %v1030, %v1029
        %v1045 = vpack.c.b16 %v1032, %v1031
        %v1046 = vpack.c.b16 %v1034, %v1033
        %v1047 = vpack.c.b16 %v1036, %v1035
        %v1048 = vpack.c.b16 %v1038, %v1037
        %v1049 = vpack.c.b16 %v1040, %v1039
        %v1050 = vpack.c.b16 %v1042, %v1041
        %1059 = vmatpush.bf16.msra.mxu0 %v1050
        %1060 = vmatpush.bf16.msra.mxu0 %v1049
        %1061 = vmatpush.bf16.msra.mxu0 %v1048
        %1062 = vmatpush.bf16.msra.mxu0 %v1047
        %1063 = vmatpush.bf16.msra.mxu0 %v1046
        %1064 = vmatpush.bf16.msra.mxu0 %v1045
        %1065 = vmatpush.bf16.msra.mxu0 %v1044
        %1066 = vmatpush.bf16.msra.mxu0 %v1043
        %1067 = vmatmul.bf16.gmra.mxu0 %v1007
        %v1068 = vpop.f32.mrf.mxu0
        %v1069 = vadd.f32 0.0, %v1068
        %v1070 = vpop.f32.mrf.mxu0
        %v1071 = vadd.f32 0.0, %v1070
        %1072 = vmatmul.bf16.gmra.mxu0 %v1008
        %v1073 = vpop.f32.mrf.mxu0
        %v1074 = vadd.f32 0.0, %v1073
        %v1075 = vpop.f32.mrf.mxu0
        %v1076 = vadd.f32 0.0, %v1075
        %1077 = vmatmul.bf16.gmra.mxu0 %v1009
        %v1078 = vpop.f32.mrf.mxu0
        %v1079 = vadd.f32 0.0, %v1078
        %v1080 = vpop.f32.mrf.mxu0
        %v1081 = vadd.f32 0.0, %v1080
        %1082 = vmatmul.bf16.gmra.mxu0 %v1010
        %v1083 = vpop.f32.mrf.mxu0
        %v1084 = vadd.f32 0.0, %v1083
        %v1085 = vpop.f32.mrf.mxu0
        %v1086 = vadd.f32 0.0, %v1085
        %1087 = vdwg.mxu0
        %v1104 = vunpack.c.l.b16 %v969
        %v1105 = vunpack.c.l.b16 %v970
        %v1106 = vunpack.c.l.b16 %v971
        %v1107 = vunpack.c.l.b16 %v972
        %v1108 = vunpack.c.l.b16 %v973
        %v1109 = vunpack.c.l.b16 %v974
        %v1110 = vunpack.c.l.b16 %v975
        %v1111 = vunpack.c.l.b16 %v976
        %v1112 = vunpack.c.l.b16 %v977
        %v1113 = vunpack.c.l.b16 %v978
        %v1114 = vunpack.c.l.b16 %v979
        %v1115 = vunpack.c.l.b16 %v980
        %v1116 = vunpack.c.l.b16 %v981
        %v1117 = vunpack.c.l.b16 %v982
        %v1118 = vunpack.c.l.b16 %v983
        %v1119 = vunpack.c.l.b16 %v984
        %v1120 = vpack.c.b16 %v1105, %v1104
        %v1121 = vpack.c.b16 %v1107, %v1106
        %v1122 = vpack.c.b16 %v1109, %v1108
        %v1123 = vpack.c.b16 %v1111, %v1110
        %v1124 = vpack.c.b16 %v1113, %v1112
        %v1125 = vpack.c.b16 %v1115, %v1114
        %v1126 = vpack.c.b16 %v1117, %v1116
        %v1127 = vpack.c.b16 %v1119, %v1118
        %1136 = vmatpush.bf16.msra.mxu0 %v1127
        %1137 = vmatpush.bf16.msra.mxu0 %v1126
        %1138 = vmatpush.bf16.msra.mxu0 %v1125
        %1139 = vmatpush.bf16.msra.mxu0 %v1124
        %1140 = vmatpush.bf16.msra.mxu0 %v1123
        %1141 = vmatpush.bf16.msra.mxu0 %v1122
        %1142 = vmatpush.bf16.msra.mxu0 %v1121
        %1143 = vmatpush.bf16.msra.mxu0 %v1120
        %1144 = vmatmul.bf16.gmra.mxu0 %v1003
        %v1145 = vpop.f32.mrf.mxu0
        %v1146 = vadd.f32 %v1069, %v1145
        %v1147 = vpop.f32.mrf.mxu0
        %v1148 = vadd.f32 %v1071, %v1147
        %1149 = vmatmul.bf16.gmra.mxu0 %v1004
        %v1150 = vpop.f32.mrf.mxu0
        %v1151 = vadd.f32 %v1074, %v1150
        %v1152 = vpop.f32.mrf.mxu0
        %v1153 = vadd.f32 %v1076, %v1152
        %1154 = vmatmul.bf16.gmra.mxu0 %v1005
        %v1155 = vpop.f32.mrf.mxu0
        %v1156 = vadd.f32 %v1079, %v1155
        %v1157 = vpop.f32.mrf.mxu0
        %v1158 = vadd.f32 %v1081, %v1157
        %1159 = vmatmul.bf16.gmra.mxu0 %v1006
        %v1160 = vpop.f32.mrf.mxu0
        %v1161 = vadd.f32 %v1084, %v1160
        %v1162 = vpop.f32.mrf.mxu0
        %v1163 = vadd.f32 %v1086, %v1162
        %1164 = vdwg.mxu0
        %v1165 = vperm.slane %v1002, 0
        %v1166 = vadd.f32 %v1146, %v1165
        %v1167 = vadd.f32 %v1148, %v1165
        %v1168 = vadd.f32 %v1151, %v1165
        %v1169 = vadd.f32 %v1153, %v1165
        %v1170 = vadd.f32 %v1156, %v1165
        %v1171 = vadd.f32 %v1158, %v1165
        %v1172 = vadd.f32 %v1161, %v1165
        %v1173 = vadd.f32 %v1163, %v1165
        %1174 = vadd.xlane.f32.xlu0 %v1166
        %v1175 = vpop.xlane.xlu0 %1174
        %1176 = vadd.xlane.f32.xlu0 %v1167
        %v1177 = vpop.xlane.xlu0 %1176
        %1178 = vadd.xlane.f32.xlu0 %v1168
        %v1179 = vpop.xlane.xlu0 %1178
        %1180 = vadd.xlane.f32.xlu0 %v1169
        %v1181 = vpop.xlane.xlu0 %1180
        %1182 = vadd.xlane.f32.xlu0 %v1170
        %v1183 = vpop.xlane.xlu0 %1182
        %1184 = vadd.xlane.f32.xlu0 %v1171
        %v1185 = vpop.xlane.xlu0 %1184
        %1186 = vadd.xlane.f32.xlu0 %v1172
        %v1187 = vpop.xlane.xlu0 %1186
        %1188 = vadd.xlane.f32.xlu0 %v1173
        %v1189 = vpop.xlane.xlu0 %1188
        %v1190 = vmul.f32 %v1175, %v374
        %v1191 = vmul.f32 %v1177, %v374
        %v1192 = vmul.f32 %v1179, %v374
        %v1193 = vmul.f32 %v1181, %v374
        %v1194 = vmul.f32 %v1183, %v374
        %v1195 = vmul.f32 %v1185, %v374
        %v1196 = vmul.f32 %v1187, %v374
        %v1197 = vmul.f32 %v1189, %v374
        %v1198 = vsub.f32 %v1166, %v1190
        %v1199 = vsub.f32 %v1167, %v1191
        %v1200 = vsub.f32 %v1168, %v1192
        %v1201 = vsub.f32 %v1169, %v1193
        %v1202 = vsub.f32 %v1170, %v1194
        %v1203 = vsub.f32 %v1171, %v1195
        %v1204 = vsub.f32 %v1172, %v1196
        %v1205 = vsub.f32 %v1173, %v1197
        %v1206 = vmul.f32 %v1198, %v1198
        %v1207 = vmul.f32 %v1199, %v1199
        %v1208 = vmul.f32 %v1200, %v1200
        %v1209 = vmul.f32 %v1201, %v1201
        %v1210 = vmul.f32 %v1202, %v1202
        %v1211 = vmul.f32 %v1203, %v1203
        %v1212 = vmul.f32 %v1204, %v1204
        %v1213 = vmul.f32 %v1205, %v1205
        %1214 = vadd.xlane.f32.xlu0 %v1206
        %v1215 = vpop.xlane.xlu0 %1214
        %1216 = vadd.xlane.f32.xlu0 %v1207
        %v1217 = vpop.xlane.xlu0 %1216
        %1218 = vadd.xlane.f32.xlu0 %v1208
        %v1219 = vpop.xlane.xlu0 %1218
        %1220 = vadd.xlane.f32.xlu0 %v1209
        %v1221 = vpop.xlane.xlu0 %1220
        %1222 = vadd.xlane.f32.xlu0 %v1210
        %v1223 = vpop.xlane.xlu0 %1222
        %1224 = vadd.xlane.f32.xlu0 %v1211
        %v1225 = vpop.xlane.xlu0 %1224
        %1226 = vadd.xlane.f32.xlu0 %v1212
        %v1227 = vpop.xlane.xlu0 %1226
        %1228 = vadd.xlane.f32.xlu0 %v1213
        %v1229 = vpop.xlane.xlu0 %1228
        %v1230 = vmul.f32 %v1215, %v374
        %v1231 = vmul.f32 %v1217, %v374
        %v1232 = vmul.f32 %v1219, %v374
        %v1233 = vmul.f32 %v1221, %v374
        %v1234 = vmul.f32 %v1223, %v374
        %v1235 = vmul.f32 %v1225, %v374
        %v1236 = vmul.f32 %v1227, %v374
        %v1237 = vmul.f32 %v1229, %v374
        %v1238 = vadd.f32 %v1230, 1e-05
        %v1239 = vadd.f32 %v1231, 1e-05
        %v1240 = vadd.f32 %v1232, 1e-05
        %v1241 = vadd.f32 %v1233, 1e-05
        %v1242 = vadd.f32 %v1234, 1e-05
        %v1243 = vadd.f32 %v1235, 1e-05
        %v1244 = vadd.f32 %v1236, 1e-05
        %v1245 = vadd.f32 %v1237, 1e-05
        %v1246 = vrsqrt.pop %v1238
        %v1247 = vmul.f32 %v1246, %v1238
        %v1248 = vmul.f32 %v1247, %v1246
        %v1249 = vmul.f32 0.5, %v1248
        %v1250 = vsub.f32 1.5, %v1249
        %v1251 = vmul.f32 %v1246, %v1250
        %vm1252 = vweird.f32 %v1238
        %vm1253 = vweird.f32 %v1246
        %vm1254 = vmor %vm1252, %vm1253
        %v1255 = vsel %vm1254, %v1246, %v1251
        %v1256 = vrsqrt.pop %v1239
        %v1257 = vmul.f32 %v1256, %v1239
        %v1258 = vmul.f32 %v1257, %v1256
        %v1259 = vmul.f32 0.5, %v1258
        %v1260 = vsub.f32 1.5, %v1259
        %v1261 = vmul.f32 %v1256, %v1260
        %vm1262 = vweird.f32 %v1239
        %vm1263 = vweird.f32 %v1256
        %vm1264 = vmor %vm1262, %vm1263
        %v1265 = vsel %vm1264, %v1256, %v1261
        %v1266 = vrsqrt.pop %v1240
        %v1267 = vmul.f32 %v1266, %v1240
        %v1268 = vmul.f32 %v1267, %v1266
        %v1269 = vmul.f32 0.5, %v1268
        %v1270 = vsub.f32 1.5, %v1269
        %v1271 = vmul.f32 %v1266, %v1270
        %vm1272 = vweird.f32 %v1240
        %vm1273 = vweird.f32 %v1266
        %vm1274 = vmor %vm1272, %vm1273
        %v1275 = vsel %vm1274, %v1266, %v1271
        %v1276 = vrsqrt.pop %v1241
        %v1277 = vmul.f32 %v1276, %v1241
        %v1278 = vmul.f32 %v1277, %v1276
        %v1279 = vmul.f32 0.5, %v1278
        %v1280 = vsub.f32 1.5, %v1279
        %v1281 = vmul.f32 %v1276, %v1280
        %vm1282 = vweird.f32 %v1241
        %vm1283 = vweird.f32 %v1276
        %vm1284 = vmor %vm1282, %vm1283
        %v1285 = vsel %vm1284, %v1276, %v1281
        %v1286 = vrsqrt.pop %v1242
        %v1287 = vmul.f32 %v1286, %v1242
        %v1288 = vmul.f32 %v1287, %v1286
        %v1289 = vmul.f32 0.5, %v1288
        %v1290 = vsub.f32 1.5, %v1289
        %v1291 = vmul.f32 %v1286, %v1290
        %vm1292 = vweird.f32 %v1242
        %vm1293 = vweird.f32 %v1286
        %vm1294 = vmor %vm1292, %vm1293
        %v1295 = vsel %vm1294, %v1286, %v1291
        %v1296 = vrsqrt.pop %v1243
        %v1297 = vmul.f32 %v1296, %v1243
        %v1298 = vmul.f32 %v1297, %v1296
        %v1299 = vmul.f32 0.5, %v1298
        %v1300 = vsub.f32 1.5, %v1299
        %v1301 = vmul.f32 %v1296, %v1300
        %vm1302 = vweird.f32 %v1243
        %vm1303 = vweird.f32 %v1296
        %vm1304 = vmor %vm1302, %vm1303
        %v1305 = vsel %vm1304, %v1296, %v1301
        %v1306 = vrsqrt.pop %v1244
        %v1307 = vmul.f32 %v1306, %v1244
        %v1308 = vmul.f32 %v1307, %v1306
        %v1309 = vmul.f32 0.5, %v1308
        %v1310 = vsub.f32 1.5, %v1309
        %v1311 = vmul.f32 %v1306, %v1310
        %vm1312 = vweird.f32 %v1244
        %vm1313 = vweird.f32 %v1306
        %vm1314 = vmor %vm1312, %vm1313
        %v1315 = vsel %vm1314, %v1306, %v1311
        %v1316 = vrsqrt.pop %v1245
        %v1317 = vmul.f32 %v1316, %v1245
        %v1318 = vmul.f32 %v1317, %v1316
        %v1319 = vmul.f32 0.5, %v1318
        %v1320 = vsub.f32 1.5, %v1319
        %v1321 = vmul.f32 %v1316, %v1320
        %vm1322 = vweird.f32 %v1245
        %vm1323 = vweird.f32 %v1316
        %vm1324 = vmor %vm1322, %vm1323
        %v1325 = vsel %vm1324, %v1316, %v1321
        %v1326 = vmul.f32 %v1198, %v1255
        %v1327 = vmul.f32 %v1199, %v1265
        %v1328 = vmul.f32 %v1200, %v1275
        %v1329 = vmul.f32 %v1201, %v1285
        %v1330 = vmul.f32 %v1202, %v1295
        %v1331 = vmul.f32 %v1203, %v1305
        %v1332 = vmul.f32 %v1204, %v1315
        %v1333 = vmul.f32 %v1205, %v1325
        %v1334 = vperm.slane %v1002, 1
        %v1335 = vmul.f32 %v1326, %v1334
        %v1336 = vmul.f32 %v1327, %v1334
        %v1337 = vmul.f32 %v1328, %v1334
        %v1338 = vmul.f32 %v1329, %v1334
        %v1339 = vmul.f32 %v1330, %v1334
        %v1340 = vmul.f32 %v1331, %v1334
        %v1341 = vmul.f32 %v1332, %v1334
        %v1342 = vmul.f32 %v1333, %v1334
        %v1343 = vperm.slane %v1002, 2
        %v1344 = vadd.f32 %v1335, %v1343
        %v1345 = vadd.f32 %v1336, %v1343
        %v1346 = vadd.f32 %v1337, %v1343
        %v1347 = vadd.f32 %v1338, %v1343
        %v1348 = vadd.f32 %v1339, %v1343
        %v1349 = vadd.f32 %v1340, %v1343
        %v1350 = vadd.f32 %v1341, %v1343
        %v1351 = vadd.f32 %v1342, %v1343
        %v1352 = vmax.f32 %v1344, 0.0
        %v1353 = vmax.f32 %v1345, 0.0
        %v1354 = vmax.f32 %v1346, 0.0
        %v1355 = vmax.f32 %v1347, 0.0
        %v1356 = vmax.f32 %v1348, 0.0
        %v1357 = vmax.f32 %v1349, 0.0
        %v1358 = vmax.f32 %v1350, 0.0
        %v1359 = vmax.f32 %v1351, 0.0
        %v1360 = vsub.f32 0.0, %v1344
        %v1361 = vsub.f32 0.0, %v1345
        %v1362 = vsub.f32 0.0, %v1346
        %v1363 = vsub.f32 0.0, %v1347
        %v1364 = vsub.f32 0.0, %v1348
        %v1365 = vsub.f32 0.0, %v1349
        %v1366 = vsub.f32 0.0, %v1350
        %v1367 = vsub.f32 0.0, %v1351
        %v1368 = vmax.f32 %v1360, 0.0
        %v1369 = vmax.f32 %v1361, 0.0
        %v1370 = vmax.f32 %v1362, 0.0
        %v1371 = vmax.f32 %v1363, 0.0
        %v1372 = vmax.f32 %v1364, 0.0
        %v1373 = vmax.f32 %v1365, 0.0
        %v1374 = vmax.f32 %v1366, 0.0
        %v1375 = vmax.f32 %v1367, 0.0
        %v1376 = vld [vmem:[%s4] sm:$0xf]
        %v1377 = vld [vmem:[%s4 + $0x4] sm:$0xf]
        %v1378 = vld [vmem:[%s4 + $0x8] sm:$0xf]
        %v1379 = vld [vmem:[%s4 + $0xc] sm:$0xf]
        %v1380 = vld [vmem:[%s4 + $0x10] sm:$0xf]
        %v1381 = vld [vmem:[%s4 + $0x14] sm:$0xf]
        %v1382 = vld [vmem:[%s4 + $0x18] sm:$0xf]
        %v1383 = vld [vmem:[%s4 + $0x1c] sm:$0xf]
        %v1384 = vld [vmem:[%s4 + $0x20] sm:$0xf]
        %v1385 = vld [vmem:[%s4 + $0x24] sm:$0xf]
        %v1386 = vld [vmem:[%s4 + $0x28] sm:$0xf]
        %v1387 = vld [vmem:[%s4 + $0x2c] sm:$0xf]
        %v1388 = vld [vmem:[%s4 + $0x30] sm:$0xf]
        %v1389 = vld [vmem:[%s4 + $0x34] sm:$0xf]
        %v1390 = vld [vmem:[%s4 + $0x38] sm:$0xf]
        %v1391 = vld [vmem:[%s4 + $0x3c] sm:$0xf]
        %v1392 = vld [vmem:[%s4 + $0x40] sm:$0xf]
        %v1393 = vld [vmem:[%s4 + $0x44] sm:$0xf]
        %v1394 = vld [vmem:[%s4 + $0x48] sm:$0xf]
        %v1395 = vld [vmem:[%s4 + $0x4c] sm:$0xf]
        %v1396 = vld [vmem:[%s4 + $0x50] sm:$0xf]
        %v1397 = vld [vmem:[%s4 + $0x54] sm:$0xf]
        %v1398 = vld [vmem:[%s4 + $0x58] sm:$0xf]
        %v1399 = vld [vmem:[%s4 + $0x5c] sm:$0xf]
        %v1400 = vld [vmem:[%s4 + $0x60] sm:$0xf]
        %v1401 = vld [vmem:[%s4 + $0x64] sm:$0xf]
        %v1402 = vld [vmem:[%s4 + $0x68] sm:$0xf]
        %v1403 = vld [vmem:[%s4 + $0x6c] sm:$0xf]
        %v1404 = vld [vmem:[%s4 + $0x70] sm:$0xf]
        %v1405 = vld [vmem:[%s4 + $0x74] sm:$0xf]
        %v1406 = vld [vmem:[%s4 + $0x78] sm:$0xf]
        %v1407 = vld [vmem:[%s4 + $0x7c] sm:$0xf]
        %v1408 = vpack.c.bf16 %v1353, %v1352
        %v1409 = vpack.c.bf16 %v1355, %v1354
        %v1410 = vpack.c.bf16 %v1357, %v1356
        %v1411 = vpack.c.bf16 %v1359, %v1358
        %v1412 = vpack.c.bf16 %v1369, %v1368
        %v1413 = vpack.c.bf16 %v1371, %v1370
        %v1414 = vpack.c.bf16 %v1373, %v1372
        %v1415 = vpack.c.bf16 %v1375, %v1374
        %v1432 = vunpack.c.l.b16 %v1392
        %v1433 = vunpack.c.l.b16 %v1393
        %v1434 = vunpack.c.l.b16 %v1394
        %v1435 = vunpack.c.l.b16 %v1395
        %v1436 = vunpack.c.l.b16 %v1396
        %v1437 = vunpack.c.l.b16 %v1397
        %v1438 = vunpack.c.l.b16 %v1398
        %v1439 = vunpack.c.l.b16 %v1399
        %v1440 = vunpack.c.l.b16 %v1400
        %v1441 = vunpack.c.l.b16 %v1401
        %v1442 = vunpack.c.l.b16 %v1402
        %v1443 = vunpack.c.l.b16 %v1403
        %v1444 = vunpack.c.l.b16 %v1404
        %v1445 = vunpack.c.l.b16 %v1405
        %v1446 = vunpack.c.l.b16 %v1406
        %v1447 = vunpack.c.l.b16 %v1407
        %v1448 = vpack.c.b16 %v1433, %v1432
        %v1449 = vpack.c.b16 %v1435, %v1434
        %v1450 = vpack.c.b16 %v1437, %v1436
        %v1451 = vpack.c.b16 %v1439, %v1438
        %v1452 = vpack.c.b16 %v1441, %v1440
        %v1453 = vpack.c.b16 %v1443, %v1442
        %v1454 = vpack.c.b16 %v1445, %v1444
        %v1455 = vpack.c.b16 %v1447, %v1446
        %1464 = vmatpush.bf16.msra.mxu0 %v1455
        %1465 = vmatpush.bf16.msra.mxu0 %v1454
        %1466 = vmatpush.bf16.msra.mxu0 %v1453
        %1467 = vmatpush.bf16.msra.mxu0 %v1452
        %1468 = vmatpush.bf16.msra.mxu0 %v1451
        %1469 = vmatpush.bf16.msra.mxu0 %v1450
        %1470 = vmatpush.bf16.msra.mxu0 %v1449
        %1471 = vmatpush.bf16.msra.mxu0 %v1448
        %1472 = vmatmul.bf16.gmra.mxu0 %v1412
        %v1473 = vpop.f32.mrf.mxu0
        %v1474 = vadd.f32 0.0, %v1473
        %v1475 = vpop.f32.mrf.mxu0
        %v1476 = vadd.f32 0.0, %v1475
        %1477 = vmatmul.bf16.gmra.mxu0 %v1413
        %v1478 = vpop.f32.mrf.mxu0
        %v1479 = vadd.f32 0.0, %v1478
        %v1480 = vpop.f32.mrf.mxu0
        %v1481 = vadd.f32 0.0, %v1480
        %1482 = vmatmul.bf16.gmra.mxu0 %v1414
        %v1483 = vpop.f32.mrf.mxu0
        %v1484 = vadd.f32 0.0, %v1483
        %v1485 = vpop.f32.mrf.mxu0
        %v1486 = vadd.f32 0.0, %v1485
        %1487 = vmatmul.bf16.gmra.mxu0 %v1415
        %v1488 = vpop.f32.mrf.mxu0
        %v1489 = vadd.f32 0.0, %v1488
        %v1490 = vpop.f32.mrf.mxu0
        %v1491 = vadd.f32 0.0, %v1490
        %1492 = vdwg.mxu0
        %v1509 = vunpack.c.l.b16 %v1376
        %v1510 = vunpack.c.l.b16 %v1377
        %v1511 = vunpack.c.l.b16 %v1378
        %v1512 = vunpack.c.l.b16 %v1379
        %v1513 = vunpack.c.l.b16 %v1380
        %v1514 = vunpack.c.l.b16 %v1381
        %v1515 = vunpack.c.l.b16 %v1382
        %v1516 = vunpack.c.l.b16 %v1383
        %v1517 = vunpack.c.l.b16 %v1384
        %v1518 = vunpack.c.l.b16 %v1385
        %v1519 = vunpack.c.l.b16 %v1386
        %v1520 = vunpack.c.l.b16 %v1387
        %v1521 = vunpack.c.l.b16 %v1388
        %v1522 = vunpack.c.l.b16 %v1389
        %v1523 = vunpack.c.l.b16 %v1390
        %v1524 = vunpack.c.l.b16 %v1391
        %v1525 = vpack.c.b16 %v1510, %v1509
        %v1526 = vpack.c.b16 %v1512, %v1511
        %v1527 = vpack.c.b16 %v1514, %v1513
        %v1528 = vpack.c.b16 %v1516, %v1515
        %v1529 = vpack.c.b16 %v1518, %v1517
        %v1530 = vpack.c.b16 %v1520, %v1519
        %v1531 = vpack.c.b16 %v1522, %v1521
        %v1532 = vpack.c.b16 %v1524, %v1523
        %1541 = vmatpush.bf16.msra.mxu0 %v1532
        %1542 = vmatpush.bf16.msra.mxu0 %v1531
        %1543 = vmatpush.bf16.msra.mxu0 %v1530
        %1544 = vmatpush.bf16.msra.mxu0 %v1529
        %1545 = vmatpush.bf16.msra.mxu0 %v1528
        %1546 = vmatpush.bf16.msra.mxu0 %v1527
        %1547 = vmatpush.bf16.msra.mxu0 %v1526
        %1548 = vmatpush.bf16.msra.mxu0 %v1525
        %1549 = vmatmul.bf16.gmra.mxu0 %v1408
        %v1550 = vpop.f32.mrf.mxu0
        %v1551 = vadd.f32 %v1474, %v1550
        %v1552 = vpop.f32.mrf.mxu0
        %v1553 = vadd.f32 %v1476, %v1552
        %1554 = vmatmul.bf16.gmra.mxu0 %v1409
        %v1555 = vpop.f32.mrf.mxu0
        %v1556 = vadd.f32 %v1479, %v1555
        %v1557 = vpop.f32.mrf.mxu0
        %v1558 = vadd.f32 %v1481, %v1557
        %1559 = vmatmul.bf16.gmra.mxu0 %v1410
        %v1560 = vpop.f32.mrf.mxu0
        %v1561 = vadd.f32 %v1484, %v1560
        %v1562 = vpop.f32.mrf.mxu0
        %v1563 = vadd.f32 %v1486, %v1562
        %1564 = vmatmul.bf16.gmra.mxu0 %v1411
        %v1565 = vpop.f32.mrf.mxu0
        %v1566 = vadd.f32 %v1489, %v1565
        %v1567 = vpop.f32.mrf.mxu0
        %v1568 = vadd.f32 %v1491, %v1567
        %1569 = vdwg.mxu0
        %v1570 = vld [vmem:[%s5] sm:$0x1]
        %v1572 = vperm.slane %v1570, 0
        %v1574 = vadd.f32 %v1551, %v1572
        %v1575 = vadd.f32 %v1553, %v1572
        %v1576 = vadd.f32 %v1556, %v1572
        %v1577 = vadd.f32 %v1558, %v1572
        %v1578 = vadd.f32 %v1561, %v1572
        %v1579 = vadd.f32 %v1563, %v1572
        %v1580 = vadd.f32 %v1566, %v1572
        %v1581 = vadd.f32 %v1568, %v1572
        %v1582 = vtanh.pop %v1574
        %v1583 = vtanh.pop %v1575
        %v1584 = vtanh.pop %v1576
        %v1585 = vtanh.pop %v1577
        %v1586 = vtanh.pop %v1578
        %v1587 = vtanh.pop %v1579
        %v1588 = vtanh.pop %v1580
        %v1589 = vtanh.pop %v1581
        %v1590 = vmax.f32 %v1582, -0.9999
        %v1591 = vmax.f32 %v1583, -0.9999
        %v1592 = vmax.f32 %v1584, -0.9999
        %v1593 = vmax.f32 %v1585, -0.9999
        %v1594 = vmax.f32 %v1586, -0.9999
        %v1595 = vmax.f32 %v1587, -0.9999
        %v1596 = vmax.f32 %v1588, -0.9999
        %v1597 = vmax.f32 %v1589, -0.9999
        %v1598 = vmin.f32 %v1590, 0.9999
        %v1599 = vmin.f32 %v1591, 0.9999
        %v1600 = vmin.f32 %v1592, 0.9999
        %v1601 = vmin.f32 %v1593, 0.9999
        %v1602 = vmin.f32 %v1594, 0.9999
        %v1603 = vmin.f32 %v1595, 0.9999
        %v1604 = vmin.f32 %v1596, 0.9999
        %v1605 = vmin.f32 %v1597, 0.9999
        %1606 = vst [vmem:[%s279] sm:$0xff] %v1598
        %1607 = vst [vmem:[%s279 + $0x8] sm:$0xff] %v1599
        %1608 = vst [vmem:[%s279 + $0x10] sm:$0xff] %v1600
        %1609 = vst [vmem:[%s279 + $0x18] sm:$0xff] %v1601
        %1610 = vst [vmem:[%s279 + $0x20] sm:$0xff] %v1602
        %1611 = vst [vmem:[%s279 + $0x28] sm:$0xff] %v1603
        %1612 = vst [vmem:[%s279 + $0x30] sm:$0xff] %v1604
        %1613 = vst [vmem:[%s279 + $0x38] sm:$0xff] %v1605
        %s1614 = sand.u32 %s161, 1
        %s1615 = scalar_lea.sflag [#allocation4], %s1614
        %s1616 = sand.u32 %s161, 1
        %s1617 = smul.addr %s1616, 64
        %s1618 = scalar_lea.vmem [#allocation7], %s1617
        // Predicated region
        $region53: #{tpu_custom_call.1} parent=43 // pred_check
          %p1619 = pneg %p171
        $region54: #{tpu_custom_call.1} parent=43 // pred_check_branch
          %1621 = sbr.rel (%p1619) target = $region56
        $region55: #{tpu_custom_call.1} parent=43 // pred_region
          %s1622 = smul.u32 8, %s22
          %1624 = vsyncadd %s1615, 0
          %s1625 = smul.addr %s1622, 8
          %s1626 = scalar_lea.hbm %s6, %s1625
          %s1627 = sshll.u32 %s1618, 4
          %s1628 = int_to_ptr.vmem [resolvable:$true] %s1627
          %s1629 = sshll.u32 %s1626, 4
          %s1630 = int_to_ptr.hbm [resolvable:$true] %s1629
          %1635 = dma.vmem_to_hbm [thread:$0]  %s1628, 1024, %s1630, %s1615, 128, 128, 8
        $region56: #{tpu_custom_call.1} parent=43 // pred_fallthru
          _
      $region44: #{tpu_custom_call.1} parent=5 // pred_fallthru
        _
      %p1636 = scmp.le.s32.totalorder 2, %s17
      // Predicated region
      $region57: #{tpu_custom_call.1} parent=5 // pred_check
        %p1637 = pneg %p1636
      $region58: #{tpu_custom_call.1} parent=5 // pred_check_branch
        %1639 = sbr.rel (%p1637) target = $region60
      $region59: #{tpu_custom_call.1} parent=5 // pred_region
        %s1640 = ssub.s32 %s17, 2
        // Predicated region
        $region61: #{tpu_custom_call.1} parent=59 // pred_check
          %p1641 = pneg %p177
        $region62: #{tpu_custom_call.1} parent=59 // pred_check_branch
          %1643 = sbr.rel (%p1641) target = $region64
        $region63: #{tpu_custom_call.1} parent=59 // pred_region
          %s1644 = sand.u32 %s162, 1
          %s1645 = scalar_lea.sflag [#allocation4], %s1644
          %s1646 = sand.u32 %s162, 1
          %s1647 = smul.addr %s1646, 64
          %s1648 = scalar_lea.vmem [#allocation7], %s1647
          %1650 = dma.done %s1645, 1024
        $region64: #{tpu_custom_call.1} parent=59 // pred_fallthru
          _
      $region60: #{tpu_custom_call.1} parent=5 // pred_fallthru
        _
    $region6: #{tpu_custom_call.1} parent=1 // loop_footer
      %s21 = sadd.s32 1, %s17
    $region7: #{tpu_custom_call.1} parent=1 // loop_footer_branch
      %16 = sbr.rel target = $region3
    $region8: #{tpu_custom_call.1} parent=1 // loop_exit
      _
    %1651 = vsyncpa [#allocation3], 1
    %s1652 = scalar_lea.sflag [#allocation3], 1
    %1653 = vsyncpa %s1652, 1
    %1654 = vsyncpa [#allocation6], 1
    %1655 = vsyncpa [#allocation4], 1
    %s1656 = scalar_lea.sflag [#allocation4], 1
    %1657 = vsyncpa %s1656, 1

</llo_original>
